<compile_context>
chip_gen: v5e
topology: v5e:2x2
jax: 0.10.0
libtpu: 0.0.40
codegen_flags: <defaults>
</compile_context>

<pallas_src>
import jax
import jax.numpy as jnp
from jax.experimental import pallas as pl
from jax.experimental.pallas import tpu as pltpu


# -----------------------------------------------------------------------------
# Kernel
# -----------------------------------------------------------------------------
def classifier_kernel(x_ref, w1_ref, b1_ref, w2_ref, b2_ref, o_ref):
    # --- Linear(512 -> 1024) with eval BN folded into W1'/b1' (bf16 in, f32 accum) ---
    h = jnp.dot(x_ref[...], w1_ref[...], preferred_element_type=jnp.float32)
    h = (h + b1_ref[...]).astype(jnp.bfloat16)        # bf16 epilogue (packed VALU)

    # --- LeakyReLU(0.2): one VALU max (bf16) ---
    h = jnp.maximum(h, h * 0.2)

    # --- Dropout(0.5): identity in eval mode ---
    # TODO(synk): training-mode stochastic dropout masking not implemented in-kernel.

    # --- Linear(1024 -> n_pad) + Sigmoid (exp on EUP) ---
    y = jnp.dot(h, w2_ref[...], preferred_element_type=jnp.float32)
    y = y + b2_ref[...]
    o_ref[...] = jax.nn.sigmoid(y)


# -----------------------------------------------------------------------------
# Wrapper
# -----------------------------------------------------------------------------
def _round_up(x, m):
    return ((x + m - 1) // m) * m


def _pick_tm(batch):
    """Batch tile: full-dim for tiny B, >=2 tiles (for v7x's 2 TCs) up to 1024 rows."""
    if batch <= 128:
        return batch                                   # single full-dim tile
    if batch <= 256:
        return 128                                     # 2 tiles
    if batch <= 2048:
        return min(1024, _round_up(pl.cdiv(batch, 2), 128))  # 2 tiles, each <= 1024
    return 1024                                        # many 1024-row tiles


def prepare_params(params, eps=1e-5):
    """One-time prep: fold eval-mode BN into Linear1, cast to bf16, pad head to 128 lanes."""
    eps = jnp.float32(eps)
    scale = params["gamma"] * jax.lax.rsqrt(params["running_var"] + eps)      # (1, 1024)
    w1 = (params["w1"].astype(jnp.float32) * scale).astype(jnp.bfloat16)      # (512, 1024)
    b1 = ((params["b1"] - params["running_mean"]) * scale
          + params["beta"]).astype(jnp.float32)                               # (1, 1024)

    n_attr = params["w2"].shape[1]
    n_pad = _round_up(n_attr, 128)                     # keep at exactly 128 for n_attr=40
    w2 = jnp.zeros((1024, n_pad), jnp.float32).at[:, :n_attr].set(params["w2"])
    w2 = w2.astype(jnp.bfloat16)
    b2 = jnp.zeros((1, n_pad), jnp.float32).at[:, :n_attr].set(params["b2"])

    return dict(w1=w1, b1=b1, w2=w2, b2=b2, n_attr=n_attr, n_pad=n_pad)


def classifier_forward(x, prepped):
    """x: any shape (B, ...) whose trailing dims flatten to 512. Returns (B, n_attr) f32."""
    B = x.shape[0]
    x2d = x.reshape(B, -1)
    assert x2d.shape[1] == 512, "flattened features must be 512"
    x_bf = x2d.astype(jnp.bfloat16)                    # no batch-pad copy; ragged tile is OK

    n_pad = prepped["n_pad"]
    TM = _pick_tm(B)
    grid = (pl.cdiv(B, TM),)

    out = pl.pallas_call(
        classifier_kernel,
        out_shape=jax.ShapeDtypeStruct((B, n_pad), jnp.float32),
        grid_spec=pltpu.PrefetchScalarGridSpec(
            num_scalar_prefetch=0,
            grid=grid,
            in_specs=[
                pl.BlockSpec((TM, 512), lambda i: (i, 0)),       # x rows (pipelined)
                pl.BlockSpec((512, 1024), lambda i: (0, 0)),     # W1' (resident)
                pl.BlockSpec((1, 1024), lambda i: (0, 0)),       # b1' (resident)
                pl.BlockSpec((1024, n_pad), lambda i: (0, 0)),   # W2 padded (resident)
                pl.BlockSpec((1, n_pad), lambda i: (0, 0)),      # b2 padded (resident)
            ],
            out_specs=pl.BlockSpec((TM, n_pad), lambda i: (i, 0)),
        ),
        compiler_params=pltpu.CompilerParams(
            dimension_semantics=("parallel",),         # batch tiles shard across v7x's 2 TCs
            vmem_limit_bytes=32 * 1024 * 1024,         # headroom for TM=1024 on v5e
        ),
    )(x_bf, prepped["w1"], prepped["b1"], prepped["w2"], prepped["b2"])

    return out[:, :prepped["n_attr"]]


# -----------------------------------------------------------------------------
# Params & reference
# -----------------------------------------------------------------------------
def init_params(key, n_attributes=40):
    ks = jax.random.split(key, 8)
    # Linear(512, 1024): weight stored as (in, out) = (512, 1024)
    w1 = jax.random.normal(ks[0], (512, 1024), jnp.float32) * 0.02
    b1 = jax.random.normal(ks[1], (1, 1024), jnp.float32) * 0.01
    # BatchNorm1d(1024): randomized running stats/affine so the fold is actually tested
    gamma = 1.0 + 0.1 * jax.random.normal(ks[2], (1, 1024), jnp.float32)
    beta = 0.1 * jax.random.normal(ks[3], (1, 1024), jnp.float32)
    running_mean = 0.1 * jax.random.normal(ks[4], (1, 1024), jnp.float32)
    running_var = jax.random.uniform(ks[5], (1, 1024), jnp.float32, 0.5, 1.5)
    # Linear(1024, n_attributes): stored as (1024, n_attributes)
    w2 = jax.random.normal(ks[6], (1024, n_attributes), jnp.float32) * 0.02
    b2 = jax.random.normal(ks[7], (1, n_attributes), jnp.float32) * 0.01
    return dict(w1=w1, b1=b1, gamma=gamma, beta=beta,
                running_mean=running_mean, running_var=running_var,
                w2=w2, b2=b2)


def classifier_reference(x, params):
    """Pure-JAX f32 reference for correctness checking (eval-mode semantics)."""
    B = x.shape[0]
    x2d = x.reshape(B, -1).astype(jnp.float32)
    h = x2d @ params["w1"] + params["b1"]
    eps = jnp.float32(1e-5)
    h = (h - params["running_mean"]) * jax.lax.rsqrt(params["running_var"] + eps)
    h = h * params["gamma"] + params["beta"]
    h = jnp.where(h >= 0, h, 0.2 * h)
    y = h @ params["w2"] + params["b2"]
    return jax.nn.sigmoid(y)


# -----------------------------------------------------------------------------
# Main
# -----------------------------------------------------------------------------
if __name__ == "__main__":
    key = jax.random.PRNGKey(0)
    kx, kp, kx2 = jax.random.split(key, 3)

    params = init_params(kp, n_attributes=40)
    prepped = prepare_params(params)                   # one-time weight prep

    # Small case: (B, C, H, W) = (2, 2, 16, 16) -> flattens to (2, 512)
    x = jax.random.normal(kx, (2, 2, 16, 16), jnp.float32)
    out = jax.block_until_ready(classifier_forward(x, prepped))

    assert out.shape == (2, 40)
    assert bool(jnp.all(jnp.isfinite(out)))
    assert bool(jnp.all((out >= 0.0) & (out <= 1.0)))  # sigmoid range
    ref = classifier_reference(x, params)
    assert bool(jnp.allclose(out, ref, atol=2e-2, rtol=0.0))  # bf16 MXU tolerance

    # Multi-tile case exercising the 2-tile grid with a ragged last tile (300 = 256 + 44).
    x2 = jax.random.normal(kx2, (300, 512), jnp.float32)
    out2 = jax.block_until_ready(classifier_forward(x2, prepped))
    ref2 = classifier_reference(x2, params)
    assert out2.shape == (300, 40)
    assert bool(jnp.all(jnp.isfinite(out2)))
    assert bool(jnp.allclose(out2, ref2, atol=2e-2, rtol=0.0))

    print("KERNEL_OK")
</pallas_src>

<mosaic_0001>
module attributes {stable_mosaic.version = 11 : i64} {
  func.func @classifier_kernel(%arg0: i32, %arg1: memref<2x512xbf16, #tpu.memory_space<vmem>>, %arg2: memref<512x1024xbf16, #tpu.memory_space<vmem>>, %arg3: memref<1x1024xf32, #tpu.memory_space<vmem>>, %arg4: memref<1024x128xbf16, #tpu.memory_space<vmem>>, %arg5: memref<1x128xf32, #tpu.memory_space<vmem>>, %arg6: memref<2x128xf32, #tpu.memory_space<vmem>>) attributes {dimension_semantics = [#tpu.dimension_semantics<parallel>], iteration_bounds = array<i64: 1>, scalar_prefetch = 0 : i64, scratch_operands = 0 : i64, tpu.core_type = #tpu.core_type<tc>, window_params = [{transform_indices = @transform_0, window_bounds = array<i64: 2, 512>}, {pipeline_mode = #tpu.pipeline_mode<synchronous>, transform_indices = @transform_1, window_bounds = array<i64: 512, 1024>}, {pipeline_mode = #tpu.pipeline_mode<synchronous>, transform_indices = @transform_2, window_bounds = array<i64: 1, 1024>}, {pipeline_mode = #tpu.pipeline_mode<synchronous>, transform_indices = @transform_3, window_bounds = array<i64: 1024, 128>}, {pipeline_mode = #tpu.pipeline_mode<synchronous>, transform_indices = @transform_4, window_bounds = array<i64: 1, 128>}, {transform_indices = @transform_5, window_bounds = array<i64: 2, 128>}]} {
    %c0 = arith.constant 0 : index
    %c0_0 = arith.constant 0 : index
    %0 = vector.load %arg1[%c0, %c0_0] : memref<2x512xbf16, #tpu.memory_space<vmem>>, vector<2x512xbf16>
    %c0_1 = arith.constant 0 : index
    %c0_2 = arith.constant 0 : index
    %1 = vector.load %arg2[%c0_1, %c0_2] : memref<512x1024xbf16, #tpu.memory_space<vmem>>, vector<512x1024xbf16>
    %cst = arith.constant dense<0.000000e+00> : vector<2x1024xf32>
    %2 = tpu.matmul %0, %1, %cst {dimension_numbers = #tpu.dot_dimension_numbers<[1], [0], [0], [1], [0, 0, 1, 1], [], []>} : vector<2x512xbf16>, vector<512x1024xbf16>, vector<2x1024xf32> -> vector<2x1024xf32>
    %c0_3 = arith.constant 0 : index
    %c0_4 = arith.constant 0 : index
    %3 = vector.load %arg3[%c0_3, %c0_4] : memref<1x1024xf32, #tpu.memory_space<vmem>>, vector<1x1024xf32>
    %4 = vector.broadcast %3 : vector<1x1024xf32> to vector<2x1024xf32>
    %5 = arith.addf %2, %4 : vector<2x1024xf32>
    %6 = arith.truncf %5 : vector<2x1024xf32> to vector<2x1024xbf16>
    %cst_5 = arith.constant 2.001950e-01 : bf16
    %7 = vector.broadcast %cst_5 : bf16 to vector<2x1024xbf16>
    %8 = arith.mulf %6, %7 : vector<2x1024xbf16>
    %9 = arith.maximumf %6, %8 : vector<2x1024xbf16>
    %c0_6 = arith.constant 0 : index
    %c0_7 = arith.constant 0 : index
    %10 = vector.load %arg4[%c0_6, %c0_7] : memref<1024x128xbf16, #tpu.memory_space<vmem>>, vector<1024x128xbf16>
    %cst_8 = arith.constant dense<0.000000e+00> : vector<2x128xf32>
    %11 = tpu.matmul %9, %10, %cst_8 {dimension_numbers = #tpu.dot_dimension_numbers<[1], [0], [0], [1], [0, 0, 1, 1], [], []>} : vector<2x1024xbf16>, vector<1024x128xbf16>, vector<2x128xf32> -> vector<2x128xf32>
    %c0_9 = arith.constant 0 : index
    %c0_10 = arith.constant 0 : index
    %12 = vector.load %arg5[%c0_9, %c0_10] : memref<1x128xf32, #tpu.memory_space<vmem>>, vector<1x128xf32>
    %13 = vector.broadcast %12 : vector<1x128xf32> to vector<2x128xf32>
    %14 = arith.addf %11, %13 : vector<2x128xf32>
    %15 = arith.negf %14 : vector<2x128xf32>
    %16 = math.exp %15 : vector<2x128xf32>
    %cst_11 = arith.constant 1.000000e+00 : f32
    %17 = vector.broadcast %cst_11 : f32 to vector<2x128xf32>
    %18 = arith.addf %17, %16 : vector<2x128xf32>
    %19 = arith.divf %17, %18 : vector<2x128xf32>
    %c0_12 = arith.constant 0 : index
    %c0_13 = arith.constant 0 : index
    %20 = vector.load %arg6[%c0_12, %c0_13] : memref<2x128xf32, #tpu.memory_space<vmem>>, vector<2x128xf32>
    tpu.vector_store %arg6[%c0_12, %c0_13], %19 {strides = array<i32>} : memref<2x128xf32, #tpu.memory_space<vmem>>, vector<2x128xf32>,
    return
  }
  func.func @transform_0(%arg0: i32) -> (i32, i32) {
    %c0_i32 = arith.constant 0 : i32
    %c0_i32_0 = arith.constant 0 : i32
    return %arg0, %c0_i32 : i32, i32
  }
  func.func @transform_1(%arg0: i32) -> (i32, i32) {
    %c0_i32 = arith.constant 0 : i32
    %c0_i32_0 = arith.constant 0 : i32
    %c0_i32_1 = arith.constant 0 : i32
    return %c0_i32, %c0_i32_0 : i32, i32
  }
  func.func @transform_2(%arg0: i32) -> (i32, i32) {
    %c0_i32 = arith.constant 0 : i32
    %c0_i32_0 = arith.constant 0 : i32
    %c0_i32_1 = arith.constant 0 : i32
    return %c0_i32, %c0_i32_0 : i32, i32
  }
  func.func @transform_3(%arg0: i32) -> (i32, i32) {
    %c0_i32 = arith.constant 0 : i32
    %c0_i32_0 = arith.constant 0 : i32
    %c0_i32_1 = arith.constant 0 : i32
    return %c0_i32, %c0_i32_0 : i32, i32
  }
  func.func @transform_4(%arg0: i32) -> (i32, i32) {
    %c0_i32 = arith.constant 0 : i32
    %c0_i32_0 = arith.constant 0 : i32
    %c0_i32_1 = arith.constant 0 : i32
    return %c0_i32, %c0_i32_0 : i32, i32
  }
  func.func @transform_5(%arg0: i32) -> (i32, i32) {
    %c0_i32 = arith.constant 0 : i32
    %c0_i32_0 = arith.constant 0 : i32
    return %arg0, %c0_i32 : i32, i32
  }
}

</mosaic_0001>

<llo_original>
// kernel: tpu_custom_call.1
$region0: #{tpu_custom_call.1}
  #allocation0 [shape = 'u32[]', space=smem, size = 0x4, offset = 0x4, fixed_abs, tag = 'smem constant byte address 0x4 - core index']
  #allocation1 [shape = 'u32[72,128]{1,0:T(1,128)}', space=vmem, size = 0x9000, scoped, tag = 'internal scratch']
  %s0 = inlined_call_operand.hbm [shape: bf16[2,512], index: 0, kind: input, shape index: {}]
  %s1 = inlined_call_operand.hbm [shape: bf16[512,1024], index: 1, kind: input, shape index: {}]
  %s2 = inlined_call_operand.hbm [shape: f32[1,1024], index: 2, kind: input, shape index: {}]
  %s3 = inlined_call_operand.hbm [shape: bf16[1024,128], index: 3, kind: input, shape index: {}]
  %s4 = inlined_call_operand.vmem [shape: f32[1,128], index: 4, kind: input, shape index: {}]
  %s5 = inlined_call_operand.hbm [shape: f32[2,128], index: 5, kind: output, shape index: {}]
  %s6 = sld [smem:[#allocation0]]
  $region46: #{tpu_custom_call.1} parent=0
    _
  %s8 = ssub.s32 1, %s6
  %s9 = scalar_select 0, %s8, %s6
  $region1: #{tpu_custom_call.1} parent=0
    #allocation2 [shape = 'u8[2048]{0}', space=vmem, size = 0x800, scoped, tag = 'input window, operand 0, single buffered']
    #allocation3 [shape = 's32[1]{0}', space=sflag, size = 0x4, scoped, tag = 'scoped memory for tpu_custom_call.1']
    #allocation4 [shape = 's32[1]{0}', space=sflag, size = 0x4, scoped, tag = 'scoped memory for tpu_custom_call.1']
    #allocation5 [shape = 'u8[1048576]{0}', space=vmem, size = 0x100000, scoped, tag = 'input window, operand 1, single buffered']
    #allocation6 [shape = 's32[1]{0}', space=sflag, size = 0x4, scoped, tag = 'scoped memory for tpu_custom_call.1']
    #allocation7 [shape = 'u8[4096]{0}', space=vmem, size = 0x1000, scoped, tag = 'input window, operand 2, single buffered']
    #allocation8 [shape = 'u8[262144]{0}', space=vmem, size = 0x40000, scoped, tag = 'input window, operand 3, single buffered']
    #allocation9 [shape = 's32[1]{0}', space=sflag, size = 0x4, scoped, tag = 'scoped memory for tpu_custom_call.1']
    #allocation10 [shape = 'u8[1024]{0}', space=vmem, size = 0x400, scoped, tag = 'output window, operand 0, single buffered']
    %10 = vsyncpa [#allocation3], 0
    %11 = vsyncpa [#allocation6], 0
    %12 = vsyncpa [#allocation9], 0
    %13 = vsyncpa [#allocation4], 0
    // Predicated region
    $region2: #{tpu_custom_call.1} parent=1 // pred_check
      _
    $region3: #{tpu_custom_call.1} parent=1 // pred_check_branch
      %15 = sbr.rel (0) target = $region5
    $region4: #{tpu_custom_call.1} parent=1 // pred_region
      %17 = vsyncadd [#allocation3], 0
      %s19 = sshll.u32 %s0, 4
      %s20 = int_to_ptr.hbm [resolvable:$true] %s19
      %s21 = sshll.u32 [#allocation2], 4
      %s22 = int_to_ptr.vmem [resolvable:$true] %s21
      %24 = dma.hbm_to_vmem [thread:$0]  %s20, 64, %s22, [#allocation3]
    $region5: #{tpu_custom_call.1} parent=1 // pred_fallthru
      _
    // Predicated region
    $region6: #{tpu_custom_call.1} parent=1 // pred_check
      _
    $region7: #{tpu_custom_call.1} parent=1 // pred_check_branch
      %26 = sbr.rel (0) target = $region9
    $region8: #{tpu_custom_call.1} parent=1 // pred_region
      %28 = vsyncadd [#allocation6], 0
      %s29 = sshll.u32 %s1, 4
      %s30 = int_to_ptr.hbm [resolvable:$true] %s29
      %s31 = sshll.u32 [#allocation5], 4
      %s32 = int_to_ptr.vmem [resolvable:$true] %s31
      %37 = dma.hbm_to_vmem [thread:$0]  %s30, 32768, %s32, [#allocation6], 512, 512, 32
    $region9: #{tpu_custom_call.1} parent=1 // pred_fallthru
      _
    // Predicated region
    $region10: #{tpu_custom_call.1} parent=1 // pred_check
      _
    $region11: #{tpu_custom_call.1} parent=1 // pred_check_branch
      %39 = sbr.rel (0) target = $region13
    $region12: #{tpu_custom_call.1} parent=1 // pred_region
      %41 = vsyncadd [#allocation6], 0
      %s43 = sshll.u32 %s2, 4
      %s44 = int_to_ptr.hbm [resolvable:$true] %s43
      %s45 = sshll.u32 [#allocation7], 4
      %s46 = int_to_ptr.vmem [resolvable:$true] %s45
      %48 = dma.hbm_to_vmem [thread:$0]  %s44, 128, %s46, [#allocation6]
    $region13: #{tpu_custom_call.1} parent=1 // pred_fallthru
      _
    // Predicated region
    $region14: #{tpu_custom_call.1} parent=1 // pred_check
      _
    $region15: #{tpu_custom_call.1} parent=1 // pred_check_branch
      %50 = sbr.rel (0) target = $region17
    $region16: #{tpu_custom_call.1} parent=1 // pred_region
      %52 = vsyncadd [#allocation9], 0
      %s53 = sshll.u32 %s3, 4
      %s54 = int_to_ptr.hbm [resolvable:$true] %s53
      %s55 = sshll.u32 [#allocation8], 4
      %s56 = int_to_ptr.vmem [resolvable:$true] %s55
      %61 = dma.hbm_to_vmem [thread:$0]  %s54, 8192, %s56, [#allocation9], 64, 64, 4
    $region17: #{tpu_custom_call.1} parent=1 // pred_fallthru
      _
    // Predicated region
    $region18: #{tpu_custom_call.1} parent=1 // pred_check
      _
    $region19: #{tpu_custom_call.1} parent=1 // pred_check_branch
      %63 = sbr.rel (0) target = $region21
    $region20: #{tpu_custom_call.1} parent=1 // pred_region
      _
    $region21: #{tpu_custom_call.1} parent=1 // pred_fallthru
      _
    // Predicated region
    $region22: #{tpu_custom_call.1} parent=1 // pred_check
      _
    $region23: #{tpu_custom_call.1} parent=1 // pred_check_branch
      %65 = sbr.rel (0) target = $region25
    $region24: #{tpu_custom_call.1} parent=1 // pred_region
      %67 = dma.done [#allocation3], 64
    $region25: #{tpu_custom_call.1} parent=1 // pred_fallthru
      _
    // Predicated region
    $region26: #{tpu_custom_call.1} parent=1 // pred_check
      _
    $region27: #{tpu_custom_call.1} parent=1 // pred_check_branch
      %69 = sbr.rel (0) target = $region29
    $region28: #{tpu_custom_call.1} parent=1 // pred_region
      %71 = dma.done [#allocation6], 32768
    $region29: #{tpu_custom_call.1} parent=1 // pred_fallthru
      _
    // Predicated region
    $region30: #{tpu_custom_call.1} parent=1 // pred_check
      _
    $region31: #{tpu_custom_call.1} parent=1 // pred_check_branch
      %73 = sbr.rel (0) target = $region33
    $region32: #{tpu_custom_call.1} parent=1 // pred_region
      %75 = dma.done [#allocation6], 128
    $region33: #{tpu_custom_call.1} parent=1 // pred_fallthru
      _
    // Predicated region
    $region34: #{tpu_custom_call.1} parent=1 // pred_check
      _
    $region35: #{tpu_custom_call.1} parent=1 // pred_check_branch
      %77 = sbr.rel (0) target = $region37
    $region36: #{tpu_custom_call.1} parent=1 // pred_region
      %79 = dma.done [#allocation9], 8192
    $region37: #{tpu_custom_call.1} parent=1 // pred_fallthru
      _
    %v80 = vld [vmem:[#allocation2] sm:$0xf]
    %v81 = vld [vmem:[#allocation5] sm:$0xff]
    %v82 = vld [vmem:[#allocation5 + $0x8] sm:$0xff]
    %v83 = vld [vmem:[#allocation5 + $0x10] sm:$0xff]
    %v84 = vld [vmem:[#allocation5 + $0x18] sm:$0xff]
    %v85 = vld [vmem:[#allocation5 + $0x20] sm:$0xff]
    %v86 = vld [vmem:[#allocation5 + $0x28] sm:$0xff]
    %v87 = vld [vmem:[#allocation5 + $0x30] sm:$0xff]
    %v88 = vld [vmem:[#allocation5 + $0x38] sm:$0xff]
    %v89 = vld [vmem:[#allocation5 + $0x40] sm:$0xff]
    %v90 = vld [vmem:[#allocation5 + $0x48] sm:$0xff]
    %v91 = vld [vmem:[#allocation5 + $0x50] sm:$0xff]
    %v92 = vld [vmem:[#allocation5 + $0x58] sm:$0xff]
    %v93 = vld [vmem:[#allocation5 + $0x60] sm:$0xff]
    %v94 = vld [vmem:[#allocation5 + $0x68] sm:$0xff]
    %v95 = vld [vmem:[#allocation5 + $0x70] sm:$0xff]
    %v96 = vld [vmem:[#allocation5 + $0x78] sm:$0xff]
    %v97 = vld [vmem:[#allocation5 + $0x80] sm:$0xff]
    %v98 = vld [vmem:[#allocation5 + $0x88] sm:$0xff]
    %v99 = vld [vmem:[#allocation5 + $0x90] sm:$0xff]
    %v100 = vld [vmem:[#allocation5 + $0x98] sm:$0xff]
    %v101 = vld [vmem:[#allocation5 + $0xa0] sm:$0xff]
    %v102 = vld [vmem:[#allocation5 + $0xa8] sm:$0xff]
    %v103 = vld [vmem:[#allocation5 + $0xb0] sm:$0xff]
    %v104 = vld [vmem:[#allocation5 + $0xb8] sm:$0xff]
    %v105 = vld [vmem:[#allocation5 + $0xc0] sm:$0xff]
    %v106 = vld [vmem:[#allocation5 + $0xc8] sm:$0xff]
    %v107 = vld [vmem:[#allocation5 + $0xd0] sm:$0xff]
    %v108 = vld [vmem:[#allocation5 + $0xd8] sm:$0xff]
    %v109 = vld [vmem:[#allocation5 + $0xe0] sm:$0xff]
    %v110 = vld [vmem:[#allocation5 + $0xe8] sm:$0xff]
    %v111 = vld [vmem:[#allocation5 + $0xf0] sm:$0xff]
    %v112 = vld [vmem:[#allocation5 + $0xf8] sm:$0xff]
    %v113 = vld [vmem:[#allocation5 + $0x100] sm:$0xff]
    %v114 = vld [vmem:[#allocation5 + $0x108] sm:$0xff]
    %v115 = vld [vmem:[#allocation5 + $0x110] sm:$0xff]
    %v116 = vld [vmem:[#allocation5 + $0x118] sm:$0xff]
    %v117 = vld [vmem:[#allocation5 + $0x120] sm:$0xff]
    %v118 = vld [vmem:[#allocation5 + $0x128] sm:$0xff]
    %v119 = vld [vmem:[#allocation5 + $0x130] sm:$0xff]
    %v120 = vld [vmem:[#allocation5 + $0x138] sm:$0xff]
    %v121 = vld [vmem:[#allocation5 + $0x140] sm:$0xff]
    %v122 = vld [vmem:[#allocation5 + $0x148] sm:$0xff]
    %v123 = vld [vmem:[#allocation5 + $0x150] sm:$0xff]
    %v124 = vld [vmem:[#allocation5 + $0x158] sm:$0xff]
    %v125 = vld [vmem:[#allocation5 + $0x160] sm:$0xff]
    %v126 = vld [vmem:[#allocation5 + $0x168] sm:$0xff]
    %v127 = vld [vmem:[#allocation5 + $0x170] sm:$0xff]
    %v128 = vld [vmem:[#allocation5 + $0x178] sm:$0xff]
    %v129 = vld [vmem:[#allocation5 + $0x180] sm:$0xff]
    %v130 = vld [vmem:[#allocation5 + $0x188] sm:$0xff]
    %v131 = vld [vmem:[#allocation5 + $0x190] sm:$0xff]
    %v132 = vld [vmem:[#allocation5 + $0x198] sm:$0xff]
    %v133 = vld [vmem:[#allocation5 + $0x1a0] sm:$0xff]
    %v134 = vld [vmem:[#allocation5 + $0x1a8] sm:$0xff]
    %v135 = vld [vmem:[#allocation5 + $0x1b0] sm:$0xff]
    %v136 = vld [vmem:[#allocation5 + $0x1b8] sm:$0xff]
    %v137 = vld [vmem:[#allocation5 + $0x1c0] sm:$0xff]
    %v138 = vld [vmem:[#allocation5 + $0x1c8] sm:$0xff]
    %v139 = vld [vmem:[#allocation5 + $0x1d0] sm:$0xff]
    %v140 = vld [vmem:[#allocation5 + $0x1d8] sm:$0xff]
    %v141 = vld [vmem:[#allocation5 + $0x1e0] sm:$0xff]
    %v142 = vld [vmem:[#allocation5 + $0x1e8] sm:$0xff]
    %v143 = vld [vmem:[#allocation5 + $0x1f0] sm:$0xff]
    %v144 = vld [vmem:[#allocation5 + $0x1f8] sm:$0xff]
    %v145 = vld [vmem:[#allocation5 + $0x200] sm:$0xff]
    %v146 = vld [vmem:[#allocation5 + $0x208] sm:$0xff]
    %v147 = vld [vmem:[#allocation5 + $0x210] sm:$0xff]
    %v148 = vld [vmem:[#allocation5 + $0x218] sm:$0xff]
    %v149 = vld [vmem:[#allocation5 + $0x220] sm:$0xff]
    %v150 = vld [vmem:[#allocation5 + $0x228] sm:$0xff]
    %v151 = vld [vmem:[#allocation5 + $0x230] sm:$0xff]
    %v152 = vld [vmem:[#allocation5 + $0x238] sm:$0xff]
    %v153 = vld [vmem:[#allocation5 + $0x240] sm:$0xff]
    %v154 = vld [vmem:[#allocation5 + $0x248] sm:$0xff]
    %v155 = vld [vmem:[#allocation5 + $0x250] sm:$0xff]
    %v156 = vld [vmem:[#allocation5 + $0x258] sm:$0xff]
    %v157 = vld [vmem:[#allocation5 + $0x260] sm:$0xff]
    %v158 = vld [vmem:[#allocation5 + $0x268] sm:$0xff]
    %v159 = vld [vmem:[#allocation5 + $0x270] sm:$0xff]
    %v160 = vld [vmem:[#allocation5 + $0x278] sm:$0xff]
    %v161 = vld [vmem:[#allocation5 + $0x280] sm:$0xff]
    %v162 = vld [vmem:[#allocation5 + $0x288] sm:$0xff]
    %v163 = vld [vmem:[#allocation5 + $0x290] sm:$0xff]
    %v164 = vld [vmem:[#allocation5 + $0x298] sm:$0xff]
    %v165 = vld [vmem:[#allocation5 + $0x2a0] sm:$0xff]
    %v166 = vld [vmem:[#allocation5 + $0x2a8] sm:$0xff]
    %v167 = vld [vmem:[#allocation5 + $0x2b0] sm:$0xff]
    %v168 = vld [vmem:[#allocation5 + $0x2b8] sm:$0xff]
    %v169 = vld [vmem:[#allocation5 + $0x2c0] sm:$0xff]
    %v170 = vld [vmem:[#allocation5 + $0x2c8] sm:$0xff]
    %v171 = vld [vmem:[#allocation5 + $0x2d0] sm:$0xff]
    %v172 = vld [vmem:[#allocation5 + $0x2d8] sm:$0xff]
    %v173 = vld [vmem:[#allocation5 + $0x2e0] sm:$0xff]
    %v174 = vld [vmem:[#allocation5 + $0x2e8] sm:$0xff]
    %v175 = vld [vmem:[#allocation5 + $0x2f0] sm:$0xff]
    %v176 = vld [vmem:[#allocation5 + $0x2f8] sm:$0xff]
    %v177 = vld [vmem:[#allocation5 + $0x300] sm:$0xff]
    %v178 = vld [vmem:[#allocation5 + $0x308] sm:$0xff]
    %v179 = vld [vmem:[#allocation5 + $0x310] sm:$0xff]
    %v180 = vld [vmem:[#allocation5 + $0x318] sm:$0xff]
    %v181 = vld [vmem:[#allocation5 + $0x320] sm:$0xff]
    %v182 = vld [vmem:[#allocation5 + $0x328] sm:$0xff]
    %v183 = vld [vmem:[#allocation5 + $0x330] sm:$0xff]
    %v184 = vld [vmem:[#allocation5 + $0x338] sm:$0xff]
    %v185 = vld [vmem:[#allocation5 + $0x340] sm:$0xff]
    %v186 = vld [vmem:[#allocation5 + $0x348] sm:$0xff]
    %v187 = vld [vmem:[#allocation5 + $0x350] sm:$0xff]
    %v188 = vld [vmem:[#allocation5 + $0x358] sm:$0xff]
    %v189 = vld [vmem:[#allocation5 + $0x360] sm:$0xff]
    %v190 = vld [vmem:[#allocation5 + $0x368] sm:$0xff]
    %v191 = vld [vmem:[#allocation5 + $0x370] sm:$0xff]
    %v192 = vld [vmem:[#allocation5 + $0x378] sm:$0xff]
    %v193 = vld [vmem:[#allocation5 + $0x380] sm:$0xff]
    %v194 = vld [vmem:[#allocation5 + $0x388] sm:$0xff]
    %v195 = vld [vmem:[#allocation5 + $0x390] sm:$0xff]
    %v196 = vld [vmem:[#allocation5 + $0x398] sm:$0xff]
    %v197 = vld [vmem:[#allocation5 + $0x3a0] sm:$0xff]
    %v198 = vld [vmem:[#allocation5 + $0x3a8] sm:$0xff]
    %v199 = vld [vmem:[#allocation5 + $0x3b0] sm:$0xff]
    %v200 = vld [vmem:[#allocation5 + $0x3b8] sm:$0xff]
    %v201 = vld [vmem:[#allocation5 + $0x3c0] sm:$0xff]
    %v202 = vld [vmem:[#allocation5 + $0x3c8] sm:$0xff]
    %v203 = vld [vmem:[#allocation5 + $0x3d0] sm:$0xff]
    %v204 = vld [vmem:[#allocation5 + $0x3d8] sm:$0xff]
    %v205 = vld [vmem:[#allocation5 + $0x3e0] sm:$0xff]
    %v206 = vld [vmem:[#allocation5 + $0x3e8] sm:$0xff]
    %v207 = vld [vmem:[#allocation5 + $0x3f0] sm:$0xff]
    %v208 = vld [vmem:[#allocation5 + $0x3f8] sm:$0xff]
    %v209 = vld [vmem:[#allocation5 + $0x400] sm:$0xff]
    %v210 = vld [vmem:[#allocation5 + $0x408] sm:$0xff]
    %v211 = vld [vmem:[#allocation5 + $0x410] sm:$0xff]
    %v212 = vld [vmem:[#allocation5 + $0x418] sm:$0xff]
    %v213 = vld [vmem:[#allocation5 + $0x420] sm:$0xff]
    %v214 = vld [vmem:[#allocation5 + $0x428] sm:$0xff]
    %v215 = vld [vmem:[#allocation5 + $0x430] sm:$0xff]
    %v216 = vld [vmem:[#allocation5 + $0x438] sm:$0xff]
    %v217 = vld [vmem:[#allocation5 + $0x440] sm:$0xff]
    %v218 = vld [vmem:[#allocation5 + $0x448] sm:$0xff]
    %v219 = vld [vmem:[#allocation5 + $0x450] sm:$0xff]
    %v220 = vld [vmem:[#allocation5 + $0x458] sm:$0xff]
    %v221 = vld [vmem:[#allocation5 + $0x460] sm:$0xff]
    %v222 = vld [vmem:[#allocation5 + $0x468] sm:$0xff]
    %v223 = vld [vmem:[#allocation5 + $0x470] sm:$0xff]
    %v224 = vld [vmem:[#allocation5 + $0x478] sm:$0xff]
    %v225 = vld [vmem:[#allocation5 + $0x480] sm:$0xff]
    %v226 = vld [vmem:[#allocation5 + $0x488] sm:$0xff]
    %v227 = vld [vmem:[#allocation5 + $0x490] sm:$0xff]
    %v228 = vld [vmem:[#allocation5 + $0x498] sm:$0xff]
    %v229 = vld [vmem:[#allocation5 + $0x4a0] sm:$0xff]
    %v230 = vld [vmem:[#allocation5 + $0x4a8] sm:$0xff]
    %v231 = vld [vmem:[#allocation5 + $0x4b0] sm:$0xff]
    %v232 = vld [vmem:[#allocation5 + $0x4b8] sm:$0xff]
    %v233 = vld [vmem:[#allocation5 + $0x4c0] sm:$0xff]
    %v234 = vld [vmem:[#allocation5 + $0x4c8] sm:$0xff]
    %v235 = vld [vmem:[#allocation5 + $0x4d0] sm:$0xff]
    %v236 = vld [vmem:[#allocation5 + $0x4d8] sm:$0xff]
    %v237 = vld [vmem:[#allocation5 + $0x4e0] sm:$0xff]
    %v238 = vld [vmem:[#allocation5 + $0x4e8] sm:$0xff]
    %v239 = vld [vmem:[#allocation5 + $0x4f0] sm:$0xff]
    %v240 = vld [vmem:[#allocation5 + $0x4f8] sm:$0xff]
    %v241 = vld [vmem:[#allocation5 + $0x500] sm:$0xff]
    %v242 = vld [vmem:[#allocation5 + $0x508] sm:$0xff]
    %v243 = vld [vmem:[#allocation5 + $0x510] sm:$0xff]
    %v244 = vld [vmem:[#allocation5 + $0x518] sm:$0xff]
    %v245 = vld [vmem:[#allocation5 + $0x520] sm:$0xff]
    %v246 = vld [vmem:[#allocation5 + $0x528] sm:$0xff]
    %v247 = vld [vmem:[#allocation5 + $0x530] sm:$0xff]
    %v248 = vld [vmem:[#allocation5 + $0x538] sm:$0xff]
    %v249 = vld [vmem:[#allocation5 + $0x540] sm:$0xff]
    %v250 = vld [vmem:[#allocation5 + $0x548] sm:$0xff]
    %v251 = vld [vmem:[#allocation5 + $0x550] sm:$0xff]
    %v252 = vld [vmem:[#allocation5 + $0x558] sm:$0xff]
    %v253 = vld [vmem:[#allocation5 + $0x560] sm:$0xff]
    %v254 = vld [vmem:[#allocation5 + $0x568] sm:$0xff]
    %v255 = vld [vmem:[#allocation5 + $0x570] sm:$0xff]
    %v256 = vld [vmem:[#allocation5 + $0x578] sm:$0xff]
    %v257 = vld [vmem:[#allocation5 + $0x580] sm:$0xff]
    %v258 = vld [vmem:[#allocation5 + $0x588] sm:$0xff]
    %v259 = vld [vmem:[#allocation5 + $0x590] sm:$0xff]
    %v260 = vld [vmem:[#allocation5 + $0x598] sm:$0xff]
    %v261 = vld [vmem:[#allocation5 + $0x5a0] sm:$0xff]
    %v262 = vld [vmem:[#allocation5 + $0x5a8] sm:$0xff]
    %v263 = vld [vmem:[#allocation5 + $0x5b0] sm:$0xff]
    %v264 = vld [vmem:[#allocation5 + $0x5b8] sm:$0xff]
    %v265 = vld [vmem:[#allocation5 + $0x5c0] sm:$0xff]
    %v266 = vld [vmem:[#allocation5 + $0x5c8] sm:$0xff]
    %v267 = vld [vmem:[#allocation5 + $0x5d0] sm:$0xff]
    %v268 = vld [vmem:[#allocation5 + $0x5d8] sm:$0xff]
    %v269 = vld [vmem:[#allocation5 + $0x5e0] sm:$0xff]
    %v270 = vld [vmem:[#allocation5 + $0x5e8] sm:$0xff]
    %v271 = vld [vmem:[#allocation5 + $0x5f0] sm:$0xff]
    %v272 = vld [vmem:[#allocation5 + $0x5f8] sm:$0xff]
    %v273 = vld [vmem:[#allocation5 + $0x600] sm:$0xff]
    %v274 = vld [vmem:[#allocation5 + $0x608] sm:$0xff]
    %v275 = vld [vmem:[#allocation5 + $0x610] sm:$0xff]
    %v276 = vld [vmem:[#allocation5 + $0x618] sm:$0xff]
    %v277 = vld [vmem:[#allocation5 + $0x620] sm:$0xff]
    %v278 = vld [vmem:[#allocation5 + $0x628] sm:$0xff]
    %v279 = vld [vmem:[#allocation5 + $0x630] sm:$0xff]
    %v280 = vld [vmem:[#allocation5 + $0x638] sm:$0xff]
    %v281 = vld [vmem:[#allocation5 + $0x640] sm:$0xff]
    %v282 = vld [vmem:[#allocation5 + $0x648] sm:$0xff]
    %v283 = vld [vmem:[#allocation5 + $0x650] sm:$0xff]
    %v284 = vld [vmem:[#allocation5 + $0x658] sm:$0xff]
    %v285 = vld [vmem:[#allocation5 + $0x660] sm:$0xff]
    %v286 = vld [vmem:[#allocation5 + $0x668] sm:$0xff]
    %v287 = vld [vmem:[#allocation5 + $0x670] sm:$0xff]
    %v288 = vld [vmem:[#allocation5 + $0x678] sm:$0xff]
    %v289 = vld [vmem:[#allocation5 + $0x680] sm:$0xff]
    %v290 = vld [vmem:[#allocation5 + $0x688] sm:$0xff]
    %v291 = vld [vmem:[#allocation5 + $0x690] sm:$0xff]
    %v292 = vld [vmem:[#allocation5 + $0x698] sm:$0xff]
    %v293 = vld [vmem:[#allocation5 + $0x6a0] sm:$0xff]
    %v294 = vld [vmem:[#allocation5 + $0x6a8] sm:$0xff]
    %v295 = vld [vmem:[#allocation5 + $0x6b0] sm:$0xff]
    %v296 = vld [vmem:[#allocation5 + $0x6b8] sm:$0xff]
    %v297 = vld [vmem:[#allocation5 + $0x6c0] sm:$0xff]
    %v298 = vld [vmem:[#allocation5 + $0x6c8] sm:$0xff]
    %v299 = vld [vmem:[#allocation5 + $0x6d0] sm:$0xff]
    %v300 = vld [vmem:[#allocation5 + $0x6d8] sm:$0xff]
    %v301 = vld [vmem:[#allocation5 + $0x6e0] sm:$0xff]
    %v302 = vld [vmem:[#allocation5 + $0x6e8] sm:$0xff]
    %v303 = vld [vmem:[#allocation5 + $0x6f0] sm:$0xff]
    %v304 = vld [vmem:[#allocation5 + $0x6f8] sm:$0xff]
    %v305 = vld [vmem:[#allocation5 + $0x700] sm:$0xff]
    %v306 = vld [vmem:[#allocation5 + $0x708] sm:$0xff]
    %v307 = vld [vmem:[#allocation5 + $0x710] sm:$0xff]
    %v308 = vld [vmem:[#allocation5 + $0x718] sm:$0xff]
    %v309 = vld [vmem:[#allocation5 + $0x720] sm:$0xff]
    %v310 = vld [vmem:[#allocation5 + $0x728] sm:$0xff]
    %v311 = vld [vmem:[#allocation5 + $0x730] sm:$0xff]
    %v312 = vld [vmem:[#allocation5 + $0x738] sm:$0xff]
    %v313 = vld [vmem:[#allocation5 + $0x740] sm:$0xff]
    %v314 = vld [vmem:[#allocation5 + $0x748] sm:$0xff]
    %v315 = vld [vmem:[#allocation5 + $0x750] sm:$0xff]
    %v316 = vld [vmem:[#allocation5 + $0x758] sm:$0xff]
    %v317 = vld [vmem:[#allocation5 + $0x760] sm:$0xff]
    %v318 = vld [vmem:[#allocation5 + $0x768] sm:$0xff]
    %v319 = vld [vmem:[#allocation5 + $0x770] sm:$0xff]
    %v320 = vld [vmem:[#allocation5 + $0x778] sm:$0xff]
    %v321 = vld [vmem:[#allocation5 + $0x780] sm:$0xff]
    %v322 = vld [vmem:[#allocation5 + $0x788] sm:$0xff]
    %v323 = vld [vmem:[#allocation5 + $0x790] sm:$0xff]
    %v324 = vld [vmem:[#allocation5 + $0x798] sm:$0xff]
    %v325 = vld [vmem:[#allocation5 + $0x7a0] sm:$0xff]
    %v326 = vld [vmem:[#allocation5 + $0x7a8] sm:$0xff]
    %v327 = vld [vmem:[#allocation5 + $0x7b0] sm:$0xff]
    %v328 = vld [vmem:[#allocation5 + $0x7b8] sm:$0xff]
    %v329 = vld [vmem:[#allocation5 + $0x7c0] sm:$0xff]
    %v330 = vld [vmem:[#allocation5 + $0x7c8] sm:$0xff]
    %v331 = vld [vmem:[#allocation5 + $0x7d0] sm:$0xff]
    %v332 = vld [vmem:[#allocation5 + $0x7d8] sm:$0xff]
    %v333 = vld [vmem:[#allocation5 + $0x7e0] sm:$0xff]
    %v334 = vld [vmem:[#allocation5 + $0x7e8] sm:$0xff]
    %v335 = vld [vmem:[#allocation5 + $0x7f0] sm:$0xff]
    %v336 = vld [vmem:[#allocation5 + $0x7f8] sm:$0xff]
    %v337 = vld [vmem:[#allocation7] sm:$0xff]
    %v339 = vperm.slane %v337, 0
    %v340 = vperm.slane %v337, 1
    %v341 = vperm.slane %v337, 2
    %v342 = vperm.slane %v337, 3
    %v343 = vperm.slane %v337, 4
    %v344 = vperm.slane %v337, 5
    %v345 = vperm.slane %v337, 6
    %v346 = vperm.slane %v337, 7
    %356 = vst [vmem:[#allocation1] ss:$9 sm:$0xff] %v80
    %v357 = vld [vmem:[#allocation1] sm:$0xff]
    %v358 = vld [vmem:[#allocation1 + $0x9] sm:$0xff]
    %v359 = vld [vmem:[#allocation1 + $0x12] sm:$0xff]
    %v360 = vld [vmem:[#allocation1 + $0x1b] sm:$0xff]
    %v621 = vunpack.c.l.b16 %v81
    %v622 = vunpack.c.h.b16 %v81
    %v623 = vunpack.c.l.b16 %v82
    %v624 = vunpack.c.h.b16 %v82
    %v625 = vunpack.c.l.b16 %v83
    %v626 = vunpack.c.h.b16 %v83
    %v627 = vunpack.c.l.b16 %v84
    %v628 = vunpack.c.h.b16 %v84
    %v629 = vunpack.c.l.b16 %v85
    %v630 = vunpack.c.h.b16 %v85
    %v631 = vunpack.c.l.b16 %v86
    %v632 = vunpack.c.h.b16 %v86
    %v633 = vunpack.c.l.b16 %v87
    %v634 = vunpack.c.h.b16 %v87
    %v635 = vunpack.c.l.b16 %v88
    %v636 = vunpack.c.h.b16 %v88
    %v637 = vunpack.c.l.b16 %v89
    %v638 = vunpack.c.h.b16 %v89
    %v639 = vunpack.c.l.b16 %v90
    %v640 = vunpack.c.h.b16 %v90
    %v641 = vunpack.c.l.b16 %v91
    %v642 = vunpack.c.h.b16 %v91
    %v643 = vunpack.c.l.b16 %v92
    %v644 = vunpack.c.h.b16 %v92
    %v645 = vunpack.c.l.b16 %v93
    %v646 = vunpack.c.h.b16 %v93
    %v647 = vunpack.c.l.b16 %v94
    %v648 = vunpack.c.h.b16 %v94
    %v649 = vunpack.c.l.b16 %v95
    %v650 = vunpack.c.h.b16 %v95
    %v651 = vunpack.c.l.b16 %v96
    %v652 = vunpack.c.h.b16 %v96
    %v653 = vunpack.c.l.b16 %v97
    %v654 = vunpack.c.h.b16 %v97
    %v655 = vunpack.c.l.b16 %v98
    %v656 = vunpack.c.h.b16 %v98
    %v657 = vunpack.c.l.b16 %v99
    %v658 = vunpack.c.h.b16 %v99
    %v659 = vunpack.c.l.b16 %v100
    %v660 = vunpack.c.h.b16 %v100
    %v661 = vunpack.c.l.b16 %v101
    %v662 = vunpack.c.h.b16 %v101
    %v663 = vunpack.c.l.b16 %v102
    %v664 = vunpack.c.h.b16 %v102
    %v665 = vunpack.c.l.b16 %v103
    %v666 = vunpack.c.h.b16 %v103
    %v667 = vunpack.c.l.b16 %v104
    %v668 = vunpack.c.h.b16 %v104
    %v669 = vunpack.c.l.b16 %v105
    %v670 = vunpack.c.h.b16 %v105
    %v671 = vunpack.c.l.b16 %v106
    %v672 = vunpack.c.h.b16 %v106
    %v673 = vunpack.c.l.b16 %v107
    %v674 = vunpack.c.h.b16 %v107
    %v675 = vunpack.c.l.b16 %v108
    %v676 = vunpack.c.h.b16 %v108
    %v677 = vunpack.c.l.b16 %v109
    %v678 = vunpack.c.h.b16 %v109
    %v679 = vunpack.c.l.b16 %v110
    %v680 = vunpack.c.h.b16 %v110
    %v681 = vunpack.c.l.b16 %v111
    %v682 = vunpack.c.h.b16 %v111
    %v683 = vunpack.c.l.b16 %v112
    %v684 = vunpack.c.h.b16 %v112
    %v685 = vunpack.c.l.b16 %v113
    %v686 = vunpack.c.h.b16 %v113
    %v687 = vunpack.c.l.b16 %v114
    %v688 = vunpack.c.h.b16 %v114
    %v689 = vunpack.c.l.b16 %v115
    %v690 = vunpack.c.h.b16 %v115
    %v691 = vunpack.c.l.b16 %v116
    %v692 = vunpack.c.h.b16 %v116
    %v693 = vunpack.c.l.b16 %v117
    %v694 = vunpack.c.h.b16 %v117
    %v695 = vunpack.c.l.b16 %v118
    %v696 = vunpack.c.h.b16 %v118
    %v697 = vunpack.c.l.b16 %v119
    %v698 = vunpack.c.h.b16 %v119
    %v699 = vunpack.c.l.b16 %v120
    %v700 = vunpack.c.h.b16 %v120
    %v701 = vunpack.c.l.b16 %v121
    %v702 = vunpack.c.h.b16 %v121
    %v703 = vunpack.c.l.b16 %v122
    %v704 = vunpack.c.h.b16 %v122
    %v705 = vunpack.c.l.b16 %v123
    %v706 = vunpack.c.h.b16 %v123
    %v707 = vunpack.c.l.b16 %v124
    %v708 = vunpack.c.h.b16 %v124
    %v709 = vunpack.c.l.b16 %v125
    %v710 = vunpack.c.h.b16 %v125
    %v711 = vunpack.c.l.b16 %v126
    %v712 = vunpack.c.h.b16 %v126
    %v713 = vunpack.c.l.b16 %v127
    %v714 = vunpack.c.h.b16 %v127
    %v715 = vunpack.c.l.b16 %v128
    %v716 = vunpack.c.h.b16 %v128
    %v717 = vunpack.c.l.b16 %v129
    %v718 = vunpack.c.h.b16 %v129
    %v719 = vunpack.c.l.b16 %v130
    %v720 = vunpack.c.h.b16 %v130
    %v721 = vunpack.c.l.b16 %v131
    %v722 = vunpack.c.h.b16 %v131
    %v723 = vunpack.c.l.b16 %v132
    %v724 = vunpack.c.h.b16 %v132
    %v725 = vunpack.c.l.b16 %v133
    %v726 = vunpack.c.h.b16 %v133
    %v727 = vunpack.c.l.b16 %v134
    %v728 = vunpack.c.h.b16 %v134
    %v729 = vunpack.c.l.b16 %v135
    %v730 = vunpack.c.h.b16 %v135
    %v731 = vunpack.c.l.b16 %v136
    %v732 = vunpack.c.h.b16 %v136
    %v733 = vunpack.c.l.b16 %v137
    %v734 = vunpack.c.h.b16 %v137
    %v735 = vunpack.c.l.b16 %v138
    %v736 = vunpack.c.h.b16 %v138
    %v737 = vunpack.c.l.b16 %v139
    %v738 = vunpack.c.h.b16 %v139
    %v739 = vunpack.c.l.b16 %v140
    %v740 = vunpack.c.h.b16 %v140
    %v741 = vunpack.c.l.b16 %v141
    %v742 = vunpack.c.h.b16 %v141
    %v743 = vunpack.c.l.b16 %v142
    %v744 = vunpack.c.h.b16 %v142
    %v745 = vunpack.c.l.b16 %v143
    %v746 = vunpack.c.h.b16 %v143
    %v747 = vunpack.c.l.b16 %v144
    %v748 = vunpack.c.h.b16 %v144
    %v749 = vunpack.c.l.b16 %v145
    %v750 = vunpack.c.h.b16 %v145
    %v751 = vunpack.c.l.b16 %v146
    %v752 = vunpack.c.h.b16 %v146
    %v753 = vunpack.c.l.b16 %v147
    %v754 = vunpack.c.h.b16 %v147
    %v755 = vunpack.c.l.b16 %v148
    %v756 = vunpack.c.h.b16 %v148
    %v757 = vunpack.c.l.b16 %v149
    %v758 = vunpack.c.h.b16 %v149
    %v759 = vunpack.c.l.b16 %v150
    %v760 = vunpack.c.h.b16 %v150
    %v761 = vunpack.c.l.b16 %v151
    %v762 = vunpack.c.h.b16 %v151
    %v763 = vunpack.c.l.b16 %v152
    %v764 = vunpack.c.h.b16 %v152
    %v765 = vunpack.c.l.b16 %v153
    %v766 = vunpack.c.h.b16 %v153
    %v767 = vunpack.c.l.b16 %v154
    %v768 = vunpack.c.h.b16 %v154
    %v769 = vunpack.c.l.b16 %v155
    %v770 = vunpack.c.h.b16 %v155
    %v771 = vunpack.c.l.b16 %v156
    %v772 = vunpack.c.h.b16 %v156
    %v773 = vunpack.c.l.b16 %v157
    %v774 = vunpack.c.h.b16 %v157
    %v775 = vunpack.c.l.b16 %v158
    %v776 = vunpack.c.h.b16 %v158
    %v777 = vunpack.c.l.b16 %v159
    %v778 = vunpack.c.h.b16 %v159
    %v779 = vunpack.c.l.b16 %v160
    %v780 = vunpack.c.h.b16 %v160
    %v781 = vunpack.c.l.b16 %v161
    %v782 = vunpack.c.h.b16 %v161
    %v783 = vunpack.c.l.b16 %v162
    %v784 = vunpack.c.h.b16 %v162
    %v785 = vunpack.c.l.b16 %v163
    %v786 = vunpack.c.h.b16 %v163
    %v787 = vunpack.c.l.b16 %v164
    %v788 = vunpack.c.h.b16 %v164
    %v789 = vunpack.c.l.b16 %v165
    %v790 = vunpack.c.h.b16 %v165
    %v791 = vunpack.c.l.b16 %v166
    %v792 = vunpack.c.h.b16 %v166
    %v793 = vunpack.c.l.b16 %v167
    %v794 = vunpack.c.h.b16 %v167
    %v795 = vunpack.c.l.b16 %v168
    %v796 = vunpack.c.h.b16 %v168
    %v797 = vunpack.c.l.b16 %v169
    %v798 = vunpack.c.h.b16 %v169
    %v799 = vunpack.c.l.b16 %v170
    %v800 = vunpack.c.h.b16 %v170
    %v801 = vunpack.c.l.b16 %v171
    %v802 = vunpack.c.h.b16 %v171
    %v803 = vunpack.c.l.b16 %v172
    %v804 = vunpack.c.h.b16 %v172
    %v805 = vunpack.c.l.b16 %v173
    %v806 = vunpack.c.h.b16 %v173
    %v807 = vunpack.c.l.b16 %v174
    %v808 = vunpack.c.h.b16 %v174
    %v809 = vunpack.c.l.b16 %v175
    %v810 = vunpack.c.h.b16 %v175
    %v811 = vunpack.c.l.b16 %v176
    %v812 = vunpack.c.h.b16 %v176
    %v813 = vunpack.c.l.b16 %v177
    %v814 = vunpack.c.h.b16 %v177
    %v815 = vunpack.c.l.b16 %v178
    %v816 = vunpack.c.h.b16 %v178
    %v817 = vunpack.c.l.b16 %v179
    %v818 = vunpack.c.h.b16 %v179
    %v819 = vunpack.c.l.b16 %v180
    %v820 = vunpack.c.h.b16 %v180
    %v821 = vunpack.c.l.b16 %v181
    %v822 = vunpack.c.h.b16 %v181
    %v823 = vunpack.c.l.b16 %v182
    %v824 = vunpack.c.h.b16 %v182
    %v825 = vunpack.c.l.b16 %v183
    %v826 = vunpack.c.h.b16 %v183
    %v827 = vunpack.c.l.b16 %v184
    %v828 = vunpack.c.h.b16 %v184
    %v829 = vunpack.c.l.b16 %v185
    %v830 = vunpack.c.h.b16 %v185
    %v831 = vunpack.c.l.b16 %v186
    %v832 = vunpack.c.h.b16 %v186
    %v833 = vunpack.c.l.b16 %v187
    %v834 = vunpack.c.h.b16 %v187
    %v835 = vunpack.c.l.b16 %v188
    %v836 = vunpack.c.h.b16 %v188
    %v837 = vunpack.c.l.b16 %v189
    %v838 = vunpack.c.h.b16 %v189
    %v839 = vunpack.c.l.b16 %v190
    %v840 = vunpack.c.h.b16 %v190
    %v841 = vunpack.c.l.b16 %v191
    %v842 = vunpack.c.h.b16 %v191
    %v843 = vunpack.c.l.b16 %v192
    %v844 = vunpack.c.h.b16 %v192
    %v845 = vunpack.c.l.b16 %v193
    %v846 = vunpack.c.h.b16 %v193
    %v847 = vunpack.c.l.b16 %v194
    %v848 = vunpack.c.h.b16 %v194
    %v849 = vunpack.c.l.b16 %v195
    %v850 = vunpack.c.h.b16 %v195
    %v851 = vunpack.c.l.b16 %v196
    %v852 = vunpack.c.h.b16 %v196
    %v853 = vunpack.c.l.b16 %v197
    %v854 = vunpack.c.h.b16 %v197
    %v855 = vunpack.c.l.b16 %v198
    %v856 = vunpack.c.h.b16 %v198
    %v857 = vunpack.c.l.b16 %v199
    %v858 = vunpack.c.h.b16 %v199
    %v859 = vunpack.c.l.b16 %v200
    %v860 = vunpack.c.h.b16 %v200
    %v861 = vunpack.c.l.b16 %v201
    %v862 = vunpack.c.h.b16 %v201
    %v863 = vunpack.c.l.b16 %v202
    %v864 = vunpack.c.h.b16 %v202
    %v865 = vunpack.c.l.b16 %v203
    %v866 = vunpack.c.h.b16 %v203
    %v867 = vunpack.c.l.b16 %v204
    %v868 = vunpack.c.h.b16 %v204
    %v869 = vunpack.c.l.b16 %v205
    %v870 = vunpack.c.h.b16 %v205
    %v871 = vunpack.c.l.b16 %v206
    %v872 = vunpack.c.h.b16 %v206
    %v873 = vunpack.c.l.b16 %v207
    %v874 = vunpack.c.h.b16 %v207
    %v875 = vunpack.c.l.b16 %v208
    %v876 = vunpack.c.h.b16 %v208
    %v877 = vunpack.c.l.b16 %v209
    %v878 = vunpack.c.h.b16 %v209
    %v879 = vunpack.c.l.b16 %v210
    %v880 = vunpack.c.h.b16 %v210
    %v881 = vunpack.c.l.b16 %v211
    %v882 = vunpack.c.h.b16 %v211
    %v883 = vunpack.c.l.b16 %v212
    %v884 = vunpack.c.h.b16 %v212
    %v885 = vunpack.c.l.b16 %v213
    %v886 = vunpack.c.h.b16 %v213
    %v887 = vunpack.c.l.b16 %v214
    %v888 = vunpack.c.h.b16 %v214
    %v889 = vunpack.c.l.b16 %v215
    %v890 = vunpack.c.h.b16 %v215
    %v891 = vunpack.c.l.b16 %v216
    %v892 = vunpack.c.h.b16 %v216
    %v893 = vunpack.c.l.b16 %v217
    %v894 = vunpack.c.h.b16 %v217
    %v895 = vunpack.c.l.b16 %v218
    %v896 = vunpack.c.h.b16 %v218
    %v897 = vunpack.c.l.b16 %v219
    %v898 = vunpack.c.h.b16 %v219
    %v899 = vunpack.c.l.b16 %v220
    %v900 = vunpack.c.h.b16 %v220
    %v901 = vunpack.c.l.b16 %v221
    %v902 = vunpack.c.h.b16 %v221
    %v903 = vunpack.c.l.b16 %v222
    %v904 = vunpack.c.h.b16 %v222
    %v905 = vunpack.c.l.b16 %v223
    %v906 = vunpack.c.h.b16 %v223
    %v907 = vunpack.c.l.b16 %v224
    %v908 = vunpack.c.h.b16 %v224
    %v909 = vunpack.c.l.b16 %v225
    %v910 = vunpack.c.h.b16 %v225
    %v911 = vunpack.c.l.b16 %v226
    %v912 = vunpack.c.h.b16 %v226
    %v913 = vunpack.c.l.b16 %v227
    %v914 = vunpack.c.h.b16 %v227
    %v915 = vunpack.c.l.b16 %v228
    %v916 = vunpack.c.h.b16 %v228
    %v917 = vunpack.c.l.b16 %v229
    %v918 = vunpack.c.h.b16 %v229
    %v919 = vunpack.c.l.b16 %v230
    %v920 = vunpack.c.h.b16 %v230
    %v921 = vunpack.c.l.b16 %v231
    %v922 = vunpack.c.h.b16 %v231
    %v923 = vunpack.c.l.b16 %v232
    %v924 = vunpack.c.h.b16 %v232
    %v925 = vunpack.c.l.b16 %v233
    %v926 = vunpack.c.h.b16 %v233
    %v927 = vunpack.c.l.b16 %v234
    %v928 = vunpack.c.h.b16 %v234
    %v929 = vunpack.c.l.b16 %v235
    %v930 = vunpack.c.h.b16 %v235
    %v931 = vunpack.c.l.b16 %v236
    %v932 = vunpack.c.h.b16 %v236
    %v933 = vunpack.c.l.b16 %v237
    %v934 = vunpack.c.h.b16 %v237
    %v935 = vunpack.c.l.b16 %v238
    %v936 = vunpack.c.h.b16 %v238
    %v937 = vunpack.c.l.b16 %v239
    %v938 = vunpack.c.h.b16 %v239
    %v939 = vunpack.c.l.b16 %v240
    %v940 = vunpack.c.h.b16 %v240
    %v941 = vunpack.c.l.b16 %v241
    %v942 = vunpack.c.h.b16 %v241
    %v943 = vunpack.c.l.b16 %v242
    %v944 = vunpack.c.h.b16 %v242
    %v945 = vunpack.c.l.b16 %v243
    %v946 = vunpack.c.h.b16 %v243
    %v947 = vunpack.c.l.b16 %v244
    %v948 = vunpack.c.h.b16 %v244
    %v949 = vunpack.c.l.b16 %v245
    %v950 = vunpack.c.h.b16 %v245
    %v951 = vunpack.c.l.b16 %v246
    %v952 = vunpack.c.h.b16 %v246
    %v953 = vunpack.c.l.b16 %v247
    %v954 = vunpack.c.h.b16 %v247
    %v955 = vunpack.c.l.b16 %v248
    %v956 = vunpack.c.h.b16 %v248
    %v957 = vunpack.c.l.b16 %v249
    %v958 = vunpack.c.h.b16 %v249
    %v959 = vunpack.c.l.b16 %v250
    %v960 = vunpack.c.h.b16 %v250
    %v961 = vunpack.c.l.b16 %v251
    %v962 = vunpack.c.h.b16 %v251
    %v963 = vunpack.c.l.b16 %v252
    %v964 = vunpack.c.h.b16 %v252
    %v965 = vunpack.c.l.b16 %v253
    %v966 = vunpack.c.h.b16 %v253
    %v967 = vunpack.c.l.b16 %v254
    %v968 = vunpack.c.h.b16 %v254
    %v969 = vunpack.c.l.b16 %v255
    %v970 = vunpack.c.h.b16 %v255
    %v971 = vunpack.c.l.b16 %v256
    %v972 = vunpack.c.h.b16 %v256
    %v973 = vunpack.c.l.b16 %v257
    %v974 = vunpack.c.h.b16 %v257
    %v975 = vunpack.c.l.b16 %v258
    %v976 = vunpack.c.h.b16 %v258
    %v977 = vunpack.c.l.b16 %v259
    %v978 = vunpack.c.h.b16 %v259
    %v979 = vunpack.c.l.b16 %v260
    %v980 = vunpack.c.h.b16 %v260
    %v981 = vunpack.c.l.b16 %v261
    %v982 = vunpack.c.h.b16 %v261
    %v983 = vunpack.c.l.b16 %v262
    %v984 = vunpack.c.h.b16 %v262
    %v985 = vunpack.c.l.b16 %v263
    %v986 = vunpack.c.h.b16 %v263
    %v987 = vunpack.c.l.b16 %v264
    %v988 = vunpack.c.h.b16 %v264
    %v989 = vunpack.c.l.b16 %v265
    %v990 = vunpack.c.h.b16 %v265
    %v991 = vunpack.c.l.b16 %v266
    %v992 = vunpack.c.h.b16 %v266
    %v993 = vunpack.c.l.b16 %v267
    %v994 = vunpack.c.h.b16 %v267
    %v995 = vunpack.c.l.b16 %v268
    %v996 = vunpack.c.h.b16 %v268
    %v997 = vunpack.c.l.b16 %v269
    %v998 = vunpack.c.h.b16 %v269
    %v999 = vunpack.c.l.b16 %v270
    %v1000 = vunpack.c.h.b16 %v270
    %v1001 = vunpack.c.l.b16 %v271
    %v1002 = vunpack.c.h.b16 %v271
    %v1003 = vunpack.c.l.b16 %v272
    %v1004 = vunpack.c.h.b16 %v272
    %v1005 = vunpack.c.l.b16 %v273
    %v1006 = vunpack.c.h.b16 %v273
    %v1007 = vunpack.c.l.b16 %v274
    %v1008 = vunpack.c.h.b16 %v274
    %v1009 = vunpack.c.l.b16 %v275
    %v1010 = vunpack.c.h.b16 %v275
    %v1011 = vunpack.c.l.b16 %v276
    %v1012 = vunpack.c.h.b16 %v276
    %v1013 = vunpack.c.l.b16 %v277
    %v1014 = vunpack.c.h.b16 %v277
    %v1015 = vunpack.c.l.b16 %v278
    %v1016 = vunpack.c.h.b16 %v278
    %v1017 = vunpack.c.l.b16 %v279
    %v1018 = vunpack.c.h.b16 %v279
    %v1019 = vunpack.c.l.b16 %v280
    %v1020 = vunpack.c.h.b16 %v280
    %v1021 = vunpack.c.l.b16 %v281
    %v1022 = vunpack.c.h.b16 %v281
    %v1023 = vunpack.c.l.b16 %v282
    %v1024 = vunpack.c.h.b16 %v282
    %v1025 = vunpack.c.l.b16 %v283
    %v1026 = vunpack.c.h.b16 %v283
    %v1027 = vunpack.c.l.b16 %v284
    %v1028 = vunpack.c.h.b16 %v284
    %v1029 = vunpack.c.l.b16 %v285
    %v1030 = vunpack.c.h.b16 %v285
    %v1031 = vunpack.c.l.b16 %v286
    %v1032 = vunpack.c.h.b16 %v286
    %v1033 = vunpack.c.l.b16 %v287
    %v1034 = vunpack.c.h.b16 %v287
    %v1035 = vunpack.c.l.b16 %v288
    %v1036 = vunpack.c.h.b16 %v288
    %v1037 = vunpack.c.l.b16 %v289
    %v1038 = vunpack.c.h.b16 %v289
    %v1039 = vunpack.c.l.b16 %v290
    %v1040 = vunpack.c.h.b16 %v290
    %v1041 = vunpack.c.l.b16 %v291
    %v1042 = vunpack.c.h.b16 %v291
    %v1043 = vunpack.c.l.b16 %v292
    %v1044 = vunpack.c.h.b16 %v292
    %v1045 = vunpack.c.l.b16 %v293
    %v1046 = vunpack.c.h.b16 %v293
    %v1047 = vunpack.c.l.b16 %v294
    %v1048 = vunpack.c.h.b16 %v294
    %v1049 = vunpack.c.l.b16 %v295
    %v1050 = vunpack.c.h.b16 %v295
    %v1051 = vunpack.c.l.b16 %v296
    %v1052 = vunpack.c.h.b16 %v296
    %v1053 = vunpack.c.l.b16 %v297
    %v1054 = vunpack.c.h.b16 %v297
    %v1055 = vunpack.c.l.b16 %v298
    %v1056 = vunpack.c.h.b16 %v298
    %v1057 = vunpack.c.l.b16 %v299
    %v1058 = vunpack.c.h.b16 %v299
    %v1059 = vunpack.c.l.b16 %v300
    %v1060 = vunpack.c.h.b16 %v300
    %v1061 = vunpack.c.l.b16 %v301
    %v1062 = vunpack.c.h.b16 %v301
    %v1063 = vunpack.c.l.b16 %v302
    %v1064 = vunpack.c.h.b16 %v302
    %v1065 = vunpack.c.l.b16 %v303
    %v1066 = vunpack.c.h.b16 %v303
    %v1067 = vunpack.c.l.b16 %v304
    %v1068 = vunpack.c.h.b16 %v304
    %v1069 = vunpack.c.l.b16 %v305
    %v1070 = vunpack.c.h.b16 %v305
    %v1071 = vunpack.c.l.b16 %v306
    %v1072 = vunpack.c.h.b16 %v306
    %v1073 = vunpack.c.l.b16 %v307
    %v1074 = vunpack.c.h.b16 %v307
    %v1075 = vunpack.c.l.b16 %v308
    %v1076 = vunpack.c.h.b16 %v308
    %v1077 = vunpack.c.l.b16 %v309
    %v1078 = vunpack.c.h.b16 %v309
    %v1079 = vunpack.c.l.b16 %v310
    %v1080 = vunpack.c.h.b16 %v310
    %v1081 = vunpack.c.l.b16 %v311
    %v1082 = vunpack.c.h.b16 %v311
    %v1083 = vunpack.c.l.b16 %v312
    %v1084 = vunpack.c.h.b16 %v312
    %v1085 = vunpack.c.l.b16 %v313
    %v1086 = vunpack.c.h.b16 %v313
    %v1087 = vunpack.c.l.b16 %v314
    %v1088 = vunpack.c.h.b16 %v314
    %v1089 = vunpack.c.l.b16 %v315
    %v1090 = vunpack.c.h.b16 %v315
    %v1091 = vunpack.c.l.b16 %v316
    %v1092 = vunpack.c.h.b16 %v316
    %v1093 = vunpack.c.l.b16 %v317
    %v1094 = vunpack.c.h.b16 %v317
    %v1095 = vunpack.c.l.b16 %v318
    %v1096 = vunpack.c.h.b16 %v318
    %v1097 = vunpack.c.l.b16 %v319
    %v1098 = vunpack.c.h.b16 %v319
    %v1099 = vunpack.c.l.b16 %v320
    %v1100 = vunpack.c.h.b16 %v320
    %v1101 = vunpack.c.l.b16 %v321
    %v1102 = vunpack.c.h.b16 %v321
    %v1103 = vunpack.c.l.b16 %v322
    %v1104 = vunpack.c.h.b16 %v322
    %v1105 = vunpack.c.l.b16 %v323
    %v1106 = vunpack.c.h.b16 %v323
    %v1107 = vunpack.c.l.b16 %v324
    %v1108 = vunpack.c.h.b16 %v324
    %v1109 = vunpack.c.l.b16 %v325
    %v1110 = vunpack.c.h.b16 %v325
    %v1111 = vunpack.c.l.b16 %v326
    %v1112 = vunpack.c.h.b16 %v326
    %v1113 = vunpack.c.l.b16 %v327
    %v1114 = vunpack.c.h.b16 %v327
    %v1115 = vunpack.c.l.b16 %v328
    %v1116 = vunpack.c.h.b16 %v328
    %v1117 = vunpack.c.l.b16 %v329
    %v1118 = vunpack.c.h.b16 %v329
    %v1119 = vunpack.c.l.b16 %v330
    %v1120 = vunpack.c.h.b16 %v330
    %v1121 = vunpack.c.l.b16 %v331
    %v1122 = vunpack.c.h.b16 %v331
    %v1123 = vunpack.c.l.b16 %v332
    %v1124 = vunpack.c.h.b16 %v332
    %v1125 = vunpack.c.l.b16 %v333
    %v1126 = vunpack.c.h.b16 %v333
    %v1127 = vunpack.c.l.b16 %v334
    %v1128 = vunpack.c.h.b16 %v334
    %v1129 = vunpack.c.l.b16 %v335
    %v1130 = vunpack.c.h.b16 %v335
    %v1131 = vunpack.c.l.b16 %v336
    %v1132 = vunpack.c.h.b16 %v336
    %v1133 = vpack.c.b16 %v629, %v621
    %v1134 = vpack.c.b16 %v630, %v622
    %v1135 = vpack.c.b16 %v631, %v623
    %v1136 = vpack.c.b16 %v632, %v624
    %v1137 = vpack.c.b16 %v633, %v625
    %v1138 = vpack.c.b16 %v634, %v626
    %v1139 = vpack.c.b16 %v635, %v627
    %v1140 = vpack.c.b16 %v636, %v628
    %v1141 = vpack.c.b16 %v645, %v637
    %v1142 = vpack.c.b16 %v646, %v638
    %v1143 = vpack.c.b16 %v647, %v639
    %v1144 = vpack.c.b16 %v648, %v640
    %v1145 = vpack.c.b16 %v649, %v641
    %v1146 = vpack.c.b16 %v650, %v642
    %v1147 = vpack.c.b16 %v651, %v643
    %v1148 = vpack.c.b16 %v652, %v644
    %v1149 = vpack.c.b16 %v661, %v653
    %v1150 = vpack.c.b16 %v662, %v654
    %v1151 = vpack.c.b16 %v663, %v655
    %v1152 = vpack.c.b16 %v664, %v656
    %v1153 = vpack.c.b16 %v665, %v657
    %v1154 = vpack.c.b16 %v666, %v658
    %v1155 = vpack.c.b16 %v667, %v659
    %v1156 = vpack.c.b16 %v668, %v660
    %v1157 = vpack.c.b16 %v677, %v669
    %v1158 = vpack.c.b16 %v678, %v670
    %v1159 = vpack.c.b16 %v679, %v671
    %v1160 = vpack.c.b16 %v680, %v672
    %v1161 = vpack.c.b16 %v681, %v673
    %v1162 = vpack.c.b16 %v682, %v674
    %v1163 = vpack.c.b16 %v683, %v675
    %v1164 = vpack.c.b16 %v684, %v676
    %v1165 = vpack.c.b16 %v693, %v685
    %v1166 = vpack.c.b16 %v694, %v686
    %v1167 = vpack.c.b16 %v695, %v687
    %v1168 = vpack.c.b16 %v696, %v688
    %v1169 = vpack.c.b16 %v697, %v689
    %v1170 = vpack.c.b16 %v698, %v690
    %v1171 = vpack.c.b16 %v699, %v691
    %v1172 = vpack.c.b16 %v700, %v692
    %v1173 = vpack.c.b16 %v709, %v701
    %v1174 = vpack.c.b16 %v710, %v702
    %v1175 = vpack.c.b16 %v711, %v703
    %v1176 = vpack.c.b16 %v712, %v704
    %v1177 = vpack.c.b16 %v713, %v705
    %v1178 = vpack.c.b16 %v714, %v706
    %v1179 = vpack.c.b16 %v715, %v707
    %v1180 = vpack.c.b16 %v716, %v708
    %v1181 = vpack.c.b16 %v725, %v717
    %v1182 = vpack.c.b16 %v726, %v718
    %v1183 = vpack.c.b16 %v727, %v719
    %v1184 = vpack.c.b16 %v728, %v720
    %v1185 = vpack.c.b16 %v729, %v721
    %v1186 = vpack.c.b16 %v730, %v722
    %v1187 = vpack.c.b16 %v731, %v723
    %v1188 = vpack.c.b16 %v732, %v724
    %v1189 = vpack.c.b16 %v741, %v733
    %v1190 = vpack.c.b16 %v742, %v734
    %v1191 = vpack.c.b16 %v743, %v735
    %v1192 = vpack.c.b16 %v744, %v736
    %v1193 = vpack.c.b16 %v745, %v737
    %v1194 = vpack.c.b16 %v746, %v738
    %v1195 = vpack.c.b16 %v747, %v739
    %v1196 = vpack.c.b16 %v748, %v740
    %v1197 = vpack.c.b16 %v757, %v749
    %v1198 = vpack.c.b16 %v758, %v750
    %v1199 = vpack.c.b16 %v759, %v751
    %v1200 = vpack.c.b16 %v760, %v752
    %v1201 = vpack.c.b16 %v761, %v753
    %v1202 = vpack.c.b16 %v762, %v754
    %v1203 = vpack.c.b16 %v763, %v755
    %v1204 = vpack.c.b16 %v764, %v756
    %v1205 = vpack.c.b16 %v773, %v765
    %v1206 = vpack.c.b16 %v774, %v766
    %v1207 = vpack.c.b16 %v775, %v767
    %v1208 = vpack.c.b16 %v776, %v768
    %v1209 = vpack.c.b16 %v777, %v769
    %v1210 = vpack.c.b16 %v778, %v770
    %v1211 = vpack.c.b16 %v779, %v771
    %v1212 = vpack.c.b16 %v780, %v772
    %v1213 = vpack.c.b16 %v789, %v781
    %v1214 = vpack.c.b16 %v790, %v782
    %v1215 = vpack.c.b16 %v791, %v783
    %v1216 = vpack.c.b16 %v792, %v784
    %v1217 = vpack.c.b16 %v793, %v785
    %v1218 = vpack.c.b16 %v794, %v786
    %v1219 = vpack.c.b16 %v795, %v787
    %v1220 = vpack.c.b16 %v796, %v788
    %v1221 = vpack.c.b16 %v805, %v797
    %v1222 = vpack.c.b16 %v806, %v798
    %v1223 = vpack.c.b16 %v807, %v799
    %v1224 = vpack.c.b16 %v808, %v800
    %v1225 = vpack.c.b16 %v809, %v801
    %v1226 = vpack.c.b16 %v810, %v802
    %v1227 = vpack.c.b16 %v811, %v803
    %v1228 = vpack.c.b16 %v812, %v804
    %v1229 = vpack.c.b16 %v821, %v813
    %v1230 = vpack.c.b16 %v822, %v814
    %v1231 = vpack.c.b16 %v823, %v815
    %v1232 = vpack.c.b16 %v824, %v816
    %v1233 = vpack.c.b16 %v825, %v817
    %v1234 = vpack.c.b16 %v826, %v818
    %v1235 = vpack.c.b16 %v827, %v819
    %v1236 = vpack.c.b16 %v828, %v820
    %v1237 = vpack.c.b16 %v837, %v829
    %v1238 = vpack.c.b16 %v838, %v830
    %v1239 = vpack.c.b16 %v839, %v831
    %v1240 = vpack.c.b16 %v840, %v832
    %v1241 = vpack.c.b16 %v841, %v833
    %v1242 = vpack.c.b16 %v842, %v834
    %v1243 = vpack.c.b16 %v843, %v835
    %v1244 = vpack.c.b16 %v844, %v836
    %v1245 = vpack.c.b16 %v853, %v845
    %v1246 = vpack.c.b16 %v854, %v846
    %v1247 = vpack.c.b16 %v855, %v847
    %v1248 = vpack.c.b16 %v856, %v848
    %v1249 = vpack.c.b16 %v857, %v849
    %v1250 = vpack.c.b16 %v858, %v850
    %v1251 = vpack.c.b16 %v859, %v851
    %v1252 = vpack.c.b16 %v860, %v852
    %v1253 = vpack.c.b16 %v869, %v861
    %v1254 = vpack.c.b16 %v870, %v862
    %v1255 = vpack.c.b16 %v871, %v863
    %v1256 = vpack.c.b16 %v872, %v864
    %v1257 = vpack.c.b16 %v873, %v865
    %v1258 = vpack.c.b16 %v874, %v866
    %v1259 = vpack.c.b16 %v875, %v867
    %v1260 = vpack.c.b16 %v876, %v868
    %v1261 = vpack.c.b16 %v885, %v877
    %v1262 = vpack.c.b16 %v886, %v878
    %v1263 = vpack.c.b16 %v887, %v879
    %v1264 = vpack.c.b16 %v888, %v880
    %v1265 = vpack.c.b16 %v889, %v881
    %v1266 = vpack.c.b16 %v890, %v882
    %v1267 = vpack.c.b16 %v891, %v883
    %v1268 = vpack.c.b16 %v892, %v884
    %v1269 = vpack.c.b16 %v901, %v893
    %v1270 = vpack.c.b16 %v902, %v894
    %v1271 = vpack.c.b16 %v903, %v895
    %v1272 = vpack.c.b16 %v904, %v896
    %v1273 = vpack.c.b16 %v905, %v897
    %v1274 = vpack.c.b16 %v906, %v898
    %v1275 = vpack.c.b16 %v907, %v899
    %v1276 = vpack.c.b16 %v908, %v900
    %v1277 = vpack.c.b16 %v917, %v909
    %v1278 = vpack.c.b16 %v918, %v910
    %v1279 = vpack.c.b16 %v919, %v911
    %v1280 = vpack.c.b16 %v920, %v912
    %v1281 = vpack.c.b16 %v921, %v913
    %v1282 = vpack.c.b16 %v922, %v914
    %v1283 = vpack.c.b16 %v923, %v915
    %v1284 = vpack.c.b16 %v924, %v916
    %v1285 = vpack.c.b16 %v933, %v925
    %v1286 = vpack.c.b16 %v934, %v926
    %v1287 = vpack.c.b16 %v935, %v927
    %v1288 = vpack.c.b16 %v936, %v928
    %v1289 = vpack.c.b16 %v937, %v929
    %v1290 = vpack.c.b16 %v938, %v930
    %v1291 = vpack.c.b16 %v939, %v931
    %v1292 = vpack.c.b16 %v940, %v932
    %v1293 = vpack.c.b16 %v949, %v941
    %v1294 = vpack.c.b16 %v950, %v942
    %v1295 = vpack.c.b16 %v951, %v943
    %v1296 = vpack.c.b16 %v952, %v944
    %v1297 = vpack.c.b16 %v953, %v945
    %v1298 = vpack.c.b16 %v954, %v946
    %v1299 = vpack.c.b16 %v955, %v947
    %v1300 = vpack.c.b16 %v956, %v948
    %v1301 = vpack.c.b16 %v965, %v957
    %v1302 = vpack.c.b16 %v966, %v958
    %v1303 = vpack.c.b16 %v967, %v959
    %v1304 = vpack.c.b16 %v968, %v960
    %v1305 = vpack.c.b16 %v969, %v961
    %v1306 = vpack.c.b16 %v970, %v962
    %v1307 = vpack.c.b16 %v971, %v963
    %v1308 = vpack.c.b16 %v972, %v964
    %v1309 = vpack.c.b16 %v981, %v973
    %v1310 = vpack.c.b16 %v982, %v974
    %v1311 = vpack.c.b16 %v983, %v975
    %v1312 = vpack.c.b16 %v984, %v976
    %v1313 = vpack.c.b16 %v985, %v977
    %v1314 = vpack.c.b16 %v986, %v978
    %v1315 = vpack.c.b16 %v987, %v979
    %v1316 = vpack.c.b16 %v988, %v980
    %v1317 = vpack.c.b16 %v997, %v989
    %v1318 = vpack.c.b16 %v998, %v990
    %v1319 = vpack.c.b16 %v999, %v991
    %v1320 = vpack.c.b16 %v1000, %v992
    %v1321 = vpack.c.b16 %v1001, %v993
    %v1322 = vpack.c.b16 %v1002, %v994
    %v1323 = vpack.c.b16 %v1003, %v995
    %v1324 = vpack.c.b16 %v1004, %v996
    %v1325 = vpack.c.b16 %v1013, %v1005
    %v1326 = vpack.c.b16 %v1014, %v1006
    %v1327 = vpack.c.b16 %v1015, %v1007
    %v1328 = vpack.c.b16 %v1016, %v1008
    %v1329 = vpack.c.b16 %v1017, %v1009
    %v1330 = vpack.c.b16 %v1018, %v1010
    %v1331 = vpack.c.b16 %v1019, %v1011
    %v1332 = vpack.c.b16 %v1020, %v1012
    %v1333 = vpack.c.b16 %v1029, %v1021
    %v1334 = vpack.c.b16 %v1030, %v1022
    %v1335 = vpack.c.b16 %v1031, %v1023
    %v1336 = vpack.c.b16 %v1032, %v1024
    %v1337 = vpack.c.b16 %v1033, %v1025
    %v1338 = vpack.c.b16 %v1034, %v1026
    %v1339 = vpack.c.b16 %v1035, %v1027
    %v1340 = vpack.c.b16 %v1036, %v1028
    %v1341 = vpack.c.b16 %v1045, %v1037
    %v1342 = vpack.c.b16 %v1046, %v1038
    %v1343 = vpack.c.b16 %v1047, %v1039
    %v1344 = vpack.c.b16 %v1048, %v1040
    %v1345 = vpack.c.b16 %v1049, %v1041
    %v1346 = vpack.c.b16 %v1050, %v1042
    %v1347 = vpack.c.b16 %v1051, %v1043
    %v1348 = vpack.c.b16 %v1052, %v1044
    %v1349 = vpack.c.b16 %v1061, %v1053
    %v1350 = vpack.c.b16 %v1062, %v1054
    %v1351 = vpack.c.b16 %v1063, %v1055
    %v1352 = vpack.c.b16 %v1064, %v1056
    %v1353 = vpack.c.b16 %v1065, %v1057
    %v1354 = vpack.c.b16 %v1066, %v1058
    %v1355 = vpack.c.b16 %v1067, %v1059
    %v1356 = vpack.c.b16 %v1068, %v1060
    %v1357 = vpack.c.b16 %v1077, %v1069
    %v1358 = vpack.c.b16 %v1078, %v1070
    %v1359 = vpack.c.b16 %v1079, %v1071
    %v1360 = vpack.c.b16 %v1080, %v1072
    %v1361 = vpack.c.b16 %v1081, %v1073
    %v1362 = vpack.c.b16 %v1082, %v1074
    %v1363 = vpack.c.b16 %v1083, %v1075
    %v1364 = vpack.c.b16 %v1084, %v1076
    %v1365 = vpack.c.b16 %v1093, %v1085
    %v1366 = vpack.c.b16 %v1094, %v1086
    %v1367 = vpack.c.b16 %v1095, %v1087
    %v1368 = vpack.c.b16 %v1096, %v1088
    %v1369 = vpack.c.b16 %v1097, %v1089
    %v1370 = vpack.c.b16 %v1098, %v1090
    %v1371 = vpack.c.b16 %v1099, %v1091
    %v1372 = vpack.c.b16 %v1100, %v1092
    %v1373 = vpack.c.b16 %v1109, %v1101
    %v1374 = vpack.c.b16 %v1110, %v1102
    %v1375 = vpack.c.b16 %v1111, %v1103
    %v1376 = vpack.c.b16 %v1112, %v1104
    %v1377 = vpack.c.b16 %v1113, %v1105
    %v1378 = vpack.c.b16 %v1114, %v1106
    %v1379 = vpack.c.b16 %v1115, %v1107
    %v1380 = vpack.c.b16 %v1116, %v1108
    %v1381 = vpack.c.b16 %v1125, %v1117
    %v1382 = vpack.c.b16 %v1126, %v1118
    %v1383 = vpack.c.b16 %v1127, %v1119
    %v1384 = vpack.c.b16 %v1128, %v1120
    %v1385 = vpack.c.b16 %v1129, %v1121
    %v1386 = vpack.c.b16 %v1130, %v1122
    %v1387 = vpack.c.b16 %v1131, %v1123
    %v1388 = vpack.c.b16 %v1132, %v1124
    %1645 = vmatpush.bf16.msra.mxu0 %v1189
    %1646 = vmatpush.bf16.msra.mxu0 %v1181
    %1647 = vmatpush.bf16.msra.mxu0 %v1173
    %1648 = vmatpush.bf16.msra.mxu0 %v1165
    %1649 = vmatpush.bf16.msra.mxu0 %v1157
    %1650 = vmatpush.bf16.msra.mxu0 %v1149
    %1651 = vmatpush.bf16.msra.mxu0 %v1141
    %1652 = vmatpush.bf16.msra.mxu0 %v1133
    %1653 = vmatmul.bf16.gmra.mxu0 %v357
    %v1654 = vpop.f32.mrf.mxu0
    %v1655 = vadd.f32 %v339, %v1654
    %v1656 = vpop.f32.mrf.mxu0
    %1657 = vdwg.mxu0
    %1658 = vmatpush.bf16.msra.mxu0 %v1253
    %1659 = vmatpush.bf16.msra.mxu0 %v1245
    %1660 = vmatpush.bf16.msra.mxu0 %v1237
    %1661 = vmatpush.bf16.msra.mxu0 %v1229
    %1662 = vmatpush.bf16.msra.mxu0 %v1221
    %1663 = vmatpush.bf16.msra.mxu0 %v1213
    %1664 = vmatpush.bf16.msra.mxu0 %v1205
    %1665 = vmatpush.bf16.msra.mxu0 %v1197
    %1666 = vmatmul.bf16.gmra.mxu0 %v358
    %v1667 = vpop.f32.mrf.mxu0
    %v1668 = vadd.f32 %v1655, %v1667
    %v1669 = vpop.f32.mrf.mxu0
    %1670 = vdwg.mxu0
    %1671 = vmatpush.bf16.msra.mxu0 %v1317
    %1672 = vmatpush.bf16.msra.mxu0 %v1309
    %1673 = vmatpush.bf16.msra.mxu0 %v1301
    %1674 = vmatpush.bf16.msra.mxu0 %v1293
    %1675 = vmatpush.bf16.msra.mxu0 %v1285
    %1676 = vmatpush.bf16.msra.mxu0 %v1277
    %1677 = vmatpush.bf16.msra.mxu0 %v1269
    %1678 = vmatpush.bf16.msra.mxu0 %v1261
    %1679 = vmatmul.bf16.gmra.mxu0 %v359
    %v1680 = vpop.f32.mrf.mxu0
    %v1681 = vadd.f32 %v1668, %v1680
    %v1682 = vpop.f32.mrf.mxu0
    %1683 = vdwg.mxu0
    %1684 = vmatpush.bf16.msra.mxu0 %v1381
    %1685 = vmatpush.bf16.msra.mxu0 %v1373
    %1686 = vmatpush.bf16.msra.mxu0 %v1365
    %1687 = vmatpush.bf16.msra.mxu0 %v1357
    %1688 = vmatpush.bf16.msra.mxu0 %v1349
    %1689 = vmatpush.bf16.msra.mxu0 %v1341
    %1690 = vmatpush.bf16.msra.mxu0 %v1333
    %1691 = vmatpush.bf16.msra.mxu0 %v1325
    %1692 = vmatmul.bf16.gmra.mxu0 %v360
    %v1693 = vpop.f32.mrf.mxu0
    %v1694 = vadd.f32 %v1681, %v1693
    %v1695 = vpop.f32.mrf.mxu0
    %1696 = vdwg.mxu0
    %1697 = vmatpush.bf16.msra.mxu0 %v1190
    %1698 = vmatpush.bf16.msra.mxu0 %v1182
    %1699 = vmatpush.bf16.msra.mxu0 %v1174
    %1700 = vmatpush.bf16.msra.mxu0 %v1166
    %1701 = vmatpush.bf16.msra.mxu0 %v1158
    %1702 = vmatpush.bf16.msra.mxu0 %v1150
    %1703 = vmatpush.bf16.msra.mxu0 %v1142
    %1704 = vmatpush.bf16.msra.mxu0 %v1134
    %1705 = vmatmul.bf16.gmra.mxu0 %v357
    %v1706 = vpop.f32.mrf.mxu0
    %v1707 = vadd.f32 %v340, %v1706
    %v1708 = vpop.f32.mrf.mxu0
    %1709 = vdwg.mxu0
    %1710 = vmatpush.bf16.msra.mxu0 %v1254
    %1711 = vmatpush.bf16.msra.mxu0 %v1246
    %1712 = vmatpush.bf16.msra.mxu0 %v1238
    %1713 = vmatpush.bf16.msra.mxu0 %v1230
    %1714 = vmatpush.bf16.msra.mxu0 %v1222
    %1715 = vmatpush.bf16.msra.mxu0 %v1214
    %1716 = vmatpush.bf16.msra.mxu0 %v1206
    %1717 = vmatpush.bf16.msra.mxu0 %v1198
    %1718 = vmatmul.bf16.gmra.mxu0 %v358
    %v1719 = vpop.f32.mrf.mxu0
    %v1720 = vadd.f32 %v1707, %v1719
    %v1721 = vpop.f32.mrf.mxu0
    %1722 = vdwg.mxu0
    %1723 = vmatpush.bf16.msra.mxu0 %v1318
    %1724 = vmatpush.bf16.msra.mxu0 %v1310
    %1725 = vmatpush.bf16.msra.mxu0 %v1302
    %1726 = vmatpush.bf16.msra.mxu0 %v1294
    %1727 = vmatpush.bf16.msra.mxu0 %v1286
    %1728 = vmatpush.bf16.msra.mxu0 %v1278
    %1729 = vmatpush.bf16.msra.mxu0 %v1270
    %1730 = vmatpush.bf16.msra.mxu0 %v1262
    %1731 = vmatmul.bf16.gmra.mxu0 %v359
    %v1732 = vpop.f32.mrf.mxu0
    %v1733 = vadd.f32 %v1720, %v1732
    %v1734 = vpop.f32.mrf.mxu0
    %1735 = vdwg.mxu0
    %1736 = vmatpush.bf16.msra.mxu0 %v1382
    %1737 = vmatpush.bf16.msra.mxu0 %v1374
    %1738 = vmatpush.bf16.msra.mxu0 %v1366
    %1739 = vmatpush.bf16.msra.mxu0 %v1358
    %1740 = vmatpush.bf16.msra.mxu0 %v1350
    %1741 = vmatpush.bf16.msra.mxu0 %v1342
    %1742 = vmatpush.bf16.msra.mxu0 %v1334
    %1743 = vmatpush.bf16.msra.mxu0 %v1326
    %1744 = vmatmul.bf16.gmra.mxu0 %v360
    %v1745 = vpop.f32.mrf.mxu0
    %v1746 = vadd.f32 %v1733, %v1745
    %v1747 = vpop.f32.mrf.mxu0
    %1748 = vdwg.mxu0
    %1749 = vmatpush.bf16.msra.mxu0 %v1191
    %1750 = vmatpush.bf16.msra.mxu0 %v1183
    %1751 = vmatpush.bf16.msra.mxu0 %v1175
    %1752 = vmatpush.bf16.msra.mxu0 %v1167
    %1753 = vmatpush.bf16.msra.mxu0 %v1159
    %1754 = vmatpush.bf16.msra.mxu0 %v1151
    %1755 = vmatpush.bf16.msra.mxu0 %v1143
    %1756 = vmatpush.bf16.msra.mxu0 %v1135
    %1757 = vmatmul.bf16.gmra.mxu0 %v357
    %v1758 = vpop.f32.mrf.mxu0
    %v1759 = vadd.f32 %v341, %v1758
    %v1760 = vpop.f32.mrf.mxu0
    %1761 = vdwg.mxu0
    %1762 = vmatpush.bf16.msra.mxu0 %v1255
    %1763 = vmatpush.bf16.msra.mxu0 %v1247
    %1764 = vmatpush.bf16.msra.mxu0 %v1239
    %1765 = vmatpush.bf16.msra.mxu0 %v1231
    %1766 = vmatpush.bf16.msra.mxu0 %v1223
    %1767 = vmatpush.bf16.msra.mxu0 %v1215
    %1768 = vmatpush.bf16.msra.mxu0 %v1207
    %1769 = vmatpush.bf16.msra.mxu0 %v1199
    %1770 = vmatmul.bf16.gmra.mxu0 %v358
    %v1771 = vpop.f32.mrf.mxu0
    %v1772 = vadd.f32 %v1759, %v1771
    %v1773 = vpop.f32.mrf.mxu0
    %1774 = vdwg.mxu0
    %1775 = vmatpush.bf16.msra.mxu0 %v1319
    %1776 = vmatpush.bf16.msra.mxu0 %v1311
    %1777 = vmatpush.bf16.msra.mxu0 %v1303
    %1778 = vmatpush.bf16.msra.mxu0 %v1295
    %1779 = vmatpush.bf16.msra.mxu0 %v1287
    %1780 = vmatpush.bf16.msra.mxu0 %v1279
    %1781 = vmatpush.bf16.msra.mxu0 %v1271
    %1782 = vmatpush.bf16.msra.mxu0 %v1263
    %1783 = vmatmul.bf16.gmra.mxu0 %v359
    %v1784 = vpop.f32.mrf.mxu0
    %v1785 = vadd.f32 %v1772, %v1784
    %v1786 = vpop.f32.mrf.mxu0
    %1787 = vdwg.mxu0
    %1788 = vmatpush.bf16.msra.mxu0 %v1383
    %1789 = vmatpush.bf16.msra.mxu0 %v1375
    %1790 = vmatpush.bf16.msra.mxu0 %v1367
    %1791 = vmatpush.bf16.msra.mxu0 %v1359
    %1792 = vmatpush.bf16.msra.mxu0 %v1351
    %1793 = vmatpush.bf16.msra.mxu0 %v1343
    %1794 = vmatpush.bf16.msra.mxu0 %v1335
    %1795 = vmatpush.bf16.msra.mxu0 %v1327
    %1796 = vmatmul.bf16.gmra.mxu0 %v360
    %v1797 = vpop.f32.mrf.mxu0
    %v1798 = vadd.f32 %v1785, %v1797
    %v1799 = vpop.f32.mrf.mxu0
    %1800 = vdwg.mxu0
    %1801 = vmatpush.bf16.msra.mxu0 %v1192
    %1802 = vmatpush.bf16.msra.mxu0 %v1184
    %1803 = vmatpush.bf16.msra.mxu0 %v1176
    %1804 = vmatpush.bf16.msra.mxu0 %v1168
    %1805 = vmatpush.bf16.msra.mxu0 %v1160
    %1806 = vmatpush.bf16.msra.mxu0 %v1152
    %1807 = vmatpush.bf16.msra.mxu0 %v1144
    %1808 = vmatpush.bf16.msra.mxu0 %v1136
    %1809 = vmatmul.bf16.gmra.mxu0 %v357
    %v1810 = vpop.f32.mrf.mxu0
    %v1811 = vadd.f32 %v342, %v1810
    %v1812 = vpop.f32.mrf.mxu0
    %1813 = vdwg.mxu0
    %1814 = vmatpush.bf16.msra.mxu0 %v1256
    %1815 = vmatpush.bf16.msra.mxu0 %v1248
    %1816 = vmatpush.bf16.msra.mxu0 %v1240
    %1817 = vmatpush.bf16.msra.mxu0 %v1232
    %1818 = vmatpush.bf16.msra.mxu0 %v1224
    %1819 = vmatpush.bf16.msra.mxu0 %v1216
    %1820 = vmatpush.bf16.msra.mxu0 %v1208
    %1821 = vmatpush.bf16.msra.mxu0 %v1200
    %1822 = vmatmul.bf16.gmra.mxu0 %v358
    %v1823 = vpop.f32.mrf.mxu0
    %v1824 = vadd.f32 %v1811, %v1823
    %v1825 = vpop.f32.mrf.mxu0
    %1826 = vdwg.mxu0
    %1827 = vmatpush.bf16.msra.mxu0 %v1320
    %1828 = vmatpush.bf16.msra.mxu0 %v1312
    %1829 = vmatpush.bf16.msra.mxu0 %v1304
    %1830 = vmatpush.bf16.msra.mxu0 %v1296
    %1831 = vmatpush.bf16.msra.mxu0 %v1288
    %1832 = vmatpush.bf16.msra.mxu0 %v1280
    %1833 = vmatpush.bf16.msra.mxu0 %v1272
    %1834 = vmatpush.bf16.msra.mxu0 %v1264
    %1835 = vmatmul.bf16.gmra.mxu0 %v359
    %v1836 = vpop.f32.mrf.mxu0
    %v1837 = vadd.f32 %v1824, %v1836
    %v1838 = vpop.f32.mrf.mxu0
    %1839 = vdwg.mxu0
    %1840 = vmatpush.bf16.msra.mxu0 %v1384
    %1841 = vmatpush.bf16.msra.mxu0 %v1376
    %1842 = vmatpush.bf16.msra.mxu0 %v1368
    %1843 = vmatpush.bf16.msra.mxu0 %v1360
    %1844 = vmatpush.bf16.msra.mxu0 %v1352
    %1845 = vmatpush.bf16.msra.mxu0 %v1344
    %1846 = vmatpush.bf16.msra.mxu0 %v1336
    %1847 = vmatpush.bf16.msra.mxu0 %v1328
    %1848 = vmatmul.bf16.gmra.mxu0 %v360
    %v1849 = vpop.f32.mrf.mxu0
    %v1850 = vadd.f32 %v1837, %v1849
    %v1851 = vpop.f32.mrf.mxu0
    %1852 = vdwg.mxu0
    %1853 = vmatpush.bf16.msra.mxu0 %v1193
    %1854 = vmatpush.bf16.msra.mxu0 %v1185
    %1855 = vmatpush.bf16.msra.mxu0 %v1177
    %1856 = vmatpush.bf16.msra.mxu0 %v1169
    %1857 = vmatpush.bf16.msra.mxu0 %v1161
    %1858 = vmatpush.bf16.msra.mxu0 %v1153
    %1859 = vmatpush.bf16.msra.mxu0 %v1145
    %1860 = vmatpush.bf16.msra.mxu0 %v1137
    %1861 = vmatmul.bf16.gmra.mxu0 %v357
    %v1862 = vpop.f32.mrf.mxu0
    %v1863 = vadd.f32 %v343, %v1862
    %v1864 = vpop.f32.mrf.mxu0
    %1865 = vdwg.mxu0
    %1866 = vmatpush.bf16.msra.mxu0 %v1257
    %1867 = vmatpush.bf16.msra.mxu0 %v1249
    %1868 = vmatpush.bf16.msra.mxu0 %v1241
    %1869 = vmatpush.bf16.msra.mxu0 %v1233
    %1870 = vmatpush.bf16.msra.mxu0 %v1225
    %1871 = vmatpush.bf16.msra.mxu0 %v1217
    %1872 = vmatpush.bf16.msra.mxu0 %v1209
    %1873 = vmatpush.bf16.msra.mxu0 %v1201
    %1874 = vmatmul.bf16.gmra.mxu0 %v358
    %v1875 = vpop.f32.mrf.mxu0
    %v1876 = vadd.f32 %v1863, %v1875
    %v1877 = vpop.f32.mrf.mxu0
    %1878 = vdwg.mxu0
    %1879 = vmatpush.bf16.msra.mxu0 %v1321
    %1880 = vmatpush.bf16.msra.mxu0 %v1313
    %1881 = vmatpush.bf16.msra.mxu0 %v1305
    %1882 = vmatpush.bf16.msra.mxu0 %v1297
    %1883 = vmatpush.bf16.msra.mxu0 %v1289
    %1884 = vmatpush.bf16.msra.mxu0 %v1281
    %1885 = vmatpush.bf16.msra.mxu0 %v1273
    %1886 = vmatpush.bf16.msra.mxu0 %v1265
    %1887 = vmatmul.bf16.gmra.mxu0 %v359
    %v1888 = vpop.f32.mrf.mxu0
    %v1889 = vadd.f32 %v1876, %v1888
    %v1890 = vpop.f32.mrf.mxu0
    %1891 = vdwg.mxu0
    %1892 = vmatpush.bf16.msra.mxu0 %v1385
    %1893 = vmatpush.bf16.msra.mxu0 %v1377
    %1894 = vmatpush.bf16.msra.mxu0 %v1369
    %1895 = vmatpush.bf16.msra.mxu0 %v1361
    %1896 = vmatpush.bf16.msra.mxu0 %v1353
    %1897 = vmatpush.bf16.msra.mxu0 %v1345
    %1898 = vmatpush.bf16.msra.mxu0 %v1337
    %1899 = vmatpush.bf16.msra.mxu0 %v1329
    %1900 = vmatmul.bf16.gmra.mxu0 %v360
    %v1901 = vpop.f32.mrf.mxu0
    %v1902 = vadd.f32 %v1889, %v1901
    %v1903 = vpop.f32.mrf.mxu0
    %1904 = vdwg.mxu0
    %1905 = vmatpush.bf16.msra.mxu0 %v1194
    %1906 = vmatpush.bf16.msra.mxu0 %v1186
    %1907 = vmatpush.bf16.msra.mxu0 %v1178
    %1908 = vmatpush.bf16.msra.mxu0 %v1170
    %1909 = vmatpush.bf16.msra.mxu0 %v1162
    %1910 = vmatpush.bf16.msra.mxu0 %v1154
    %1911 = vmatpush.bf16.msra.mxu0 %v1146
    %1912 = vmatpush.bf16.msra.mxu0 %v1138
    %1913 = vmatmul.bf16.gmra.mxu0 %v357
    %v1914 = vpop.f32.mrf.mxu0
    %v1915 = vadd.f32 %v344, %v1914
    %v1916 = vpop.f32.mrf.mxu0
    %1917 = vdwg.mxu0
    %1918 = vmatpush.bf16.msra.mxu0 %v1258
    %1919 = vmatpush.bf16.msra.mxu0 %v1250
    %1920 = vmatpush.bf16.msra.mxu0 %v1242
    %1921 = vmatpush.bf16.msra.mxu0 %v1234
    %1922 = vmatpush.bf16.msra.mxu0 %v1226
    %1923 = vmatpush.bf16.msra.mxu0 %v1218
    %1924 = vmatpush.bf16.msra.mxu0 %v1210
    %1925 = vmatpush.bf16.msra.mxu0 %v1202
    %1926 = vmatmul.bf16.gmra.mxu0 %v358
    %v1927 = vpop.f32.mrf.mxu0
    %v1928 = vadd.f32 %v1915, %v1927
    %v1929 = vpop.f32.mrf.mxu0
    %1930 = vdwg.mxu0
    %1931 = vmatpush.bf16.msra.mxu0 %v1322
    %1932 = vmatpush.bf16.msra.mxu0 %v1314
    %1933 = vmatpush.bf16.msra.mxu0 %v1306
    %1934 = vmatpush.bf16.msra.mxu0 %v1298
    %1935 = vmatpush.bf16.msra.mxu0 %v1290
    %1936 = vmatpush.bf16.msra.mxu0 %v1282
    %1937 = vmatpush.bf16.msra.mxu0 %v1274
    %1938 = vmatpush.bf16.msra.mxu0 %v1266
    %1939 = vmatmul.bf16.gmra.mxu0 %v359
    %v1940 = vpop.f32.mrf.mxu0
    %v1941 = vadd.f32 %v1928, %v1940
    %v1942 = vpop.f32.mrf.mxu0
    %1943 = vdwg.mxu0
    %1944 = vmatpush.bf16.msra.mxu0 %v1386
    %1945 = vmatpush.bf16.msra.mxu0 %v1378
    %1946 = vmatpush.bf16.msra.mxu0 %v1370
    %1947 = vmatpush.bf16.msra.mxu0 %v1362
    %1948 = vmatpush.bf16.msra.mxu0 %v1354
    %1949 = vmatpush.bf16.msra.mxu0 %v1346
    %1950 = vmatpush.bf16.msra.mxu0 %v1338
    %1951 = vmatpush.bf16.msra.mxu0 %v1330
    %1952 = vmatmul.bf16.gmra.mxu0 %v360
    %v1953 = vpop.f32.mrf.mxu0
    %v1954 = vadd.f32 %v1941, %v1953
    %v1955 = vpop.f32.mrf.mxu0
    %1956 = vdwg.mxu0
    %1957 = vmatpush.bf16.msra.mxu0 %v1195
    %1958 = vmatpush.bf16.msra.mxu0 %v1187
    %1959 = vmatpush.bf16.msra.mxu0 %v1179
    %1960 = vmatpush.bf16.msra.mxu0 %v1171
    %1961 = vmatpush.bf16.msra.mxu0 %v1163
    %1962 = vmatpush.bf16.msra.mxu0 %v1155
    %1963 = vmatpush.bf16.msra.mxu0 %v1147
    %1964 = vmatpush.bf16.msra.mxu0 %v1139
    %1965 = vmatmul.bf16.gmra.mxu0 %v357
    %v1966 = vpop.f32.mrf.mxu0
    %v1967 = vadd.f32 %v345, %v1966
    %v1968 = vpop.f32.mrf.mxu0
    %1969 = vdwg.mxu0
    %1970 = vmatpush.bf16.msra.mxu0 %v1259
    %1971 = vmatpush.bf16.msra.mxu0 %v1251
    %1972 = vmatpush.bf16.msra.mxu0 %v1243
    %1973 = vmatpush.bf16.msra.mxu0 %v1235
    %1974 = vmatpush.bf16.msra.mxu0 %v1227
    %1975 = vmatpush.bf16.msra.mxu0 %v1219
    %1976 = vmatpush.bf16.msra.mxu0 %v1211
    %1977 = vmatpush.bf16.msra.mxu0 %v1203
    %1978 = vmatmul.bf16.gmra.mxu0 %v358
    %v1979 = vpop.f32.mrf.mxu0
    %v1980 = vadd.f32 %v1967, %v1979
    %v1981 = vpop.f32.mrf.mxu0
    %1982 = vdwg.mxu0
    %1983 = vmatpush.bf16.msra.mxu0 %v1323
    %1984 = vmatpush.bf16.msra.mxu0 %v1315
    %1985 = vmatpush.bf16.msra.mxu0 %v1307
    %1986 = vmatpush.bf16.msra.mxu0 %v1299
    %1987 = vmatpush.bf16.msra.mxu0 %v1291
    %1988 = vmatpush.bf16.msra.mxu0 %v1283
    %1989 = vmatpush.bf16.msra.mxu0 %v1275
    %1990 = vmatpush.bf16.msra.mxu0 %v1267
    %1991 = vmatmul.bf16.gmra.mxu0 %v359
    %v1992 = vpop.f32.mrf.mxu0
    %v1993 = vadd.f32 %v1980, %v1992
    %v1994 = vpop.f32.mrf.mxu0
    %1995 = vdwg.mxu0
    %1996 = vmatpush.bf16.msra.mxu0 %v1387
    %1997 = vmatpush.bf16.msra.mxu0 %v1379
    %1998 = vmatpush.bf16.msra.mxu0 %v1371
    %1999 = vmatpush.bf16.msra.mxu0 %v1363
    %2000 = vmatpush.bf16.msra.mxu0 %v1355
    %2001 = vmatpush.bf16.msra.mxu0 %v1347
    %2002 = vmatpush.bf16.msra.mxu0 %v1339
    %2003 = vmatpush.bf16.msra.mxu0 %v1331
    %2004 = vmatmul.bf16.gmra.mxu0 %v360
    %v2005 = vpop.f32.mrf.mxu0
    %v2006 = vadd.f32 %v1993, %v2005
    %v2007 = vpop.f32.mrf.mxu0
    %2008 = vdwg.mxu0
    %2009 = vmatpush.bf16.msra.mxu0 %v1196
    %2010 = vmatpush.bf16.msra.mxu0 %v1188
    %2011 = vmatpush.bf16.msra.mxu0 %v1180
    %2012 = vmatpush.bf16.msra.mxu0 %v1172
    %2013 = vmatpush.bf16.msra.mxu0 %v1164
    %2014 = vmatpush.bf16.msra.mxu0 %v1156
    %2015 = vmatpush.bf16.msra.mxu0 %v1148
    %2016 = vmatpush.bf16.msra.mxu0 %v1140
    %2017 = vmatmul.bf16.gmra.mxu0 %v357
    %v2018 = vpop.f32.mrf.mxu0
    %v2019 = vadd.f32 %v346, %v2018
    %v2020 = vpop.f32.mrf.mxu0
    %2021 = vdwg.mxu0
    %2022 = vmatpush.bf16.msra.mxu0 %v1260
    %2023 = vmatpush.bf16.msra.mxu0 %v1252
    %2024 = vmatpush.bf16.msra.mxu0 %v1244
    %2025 = vmatpush.bf16.msra.mxu0 %v1236
    %2026 = vmatpush.bf16.msra.mxu0 %v1228
    %2027 = vmatpush.bf16.msra.mxu0 %v1220
    %2028 = vmatpush.bf16.msra.mxu0 %v1212
    %2029 = vmatpush.bf16.msra.mxu0 %v1204
    %2030 = vmatmul.bf16.gmra.mxu0 %v358
    %v2031 = vpop.f32.mrf.mxu0
    %v2032 = vadd.f32 %v2019, %v2031
    %v2033 = vpop.f32.mrf.mxu0
    %2034 = vdwg.mxu0
    %2035 = vmatpush.bf16.msra.mxu0 %v1324
    %2036 = vmatpush.bf16.msra.mxu0 %v1316
    %2037 = vmatpush.bf16.msra.mxu0 %v1308
    %2038 = vmatpush.bf16.msra.mxu0 %v1300
    %2039 = vmatpush.bf16.msra.mxu0 %v1292
    %2040 = vmatpush.bf16.msra.mxu0 %v1284
    %2041 = vmatpush.bf16.msra.mxu0 %v1276
    %2042 = vmatpush.bf16.msra.mxu0 %v1268
    %2043 = vmatmul.bf16.gmra.mxu0 %v359
    %v2044 = vpop.f32.mrf.mxu0
    %v2045 = vadd.f32 %v2032, %v2044
    %v2046 = vpop.f32.mrf.mxu0
    %2047 = vdwg.mxu0
    %2048 = vmatpush.bf16.msra.mxu0 %v1388
    %2049 = vmatpush.bf16.msra.mxu0 %v1380
    %2050 = vmatpush.bf16.msra.mxu0 %v1372
    %2051 = vmatpush.bf16.msra.mxu0 %v1364
    %2052 = vmatpush.bf16.msra.mxu0 %v1356
    %2053 = vmatpush.bf16.msra.mxu0 %v1348
    %2054 = vmatpush.bf16.msra.mxu0 %v1340
    %2055 = vmatpush.bf16.msra.mxu0 %v1332
    %2056 = vmatmul.bf16.gmra.mxu0 %v360
    %v2057 = vpop.f32.mrf.mxu0
    %v2058 = vadd.f32 %v2045, %v2057
    %v2059 = vpop.f32.mrf.mxu0
    %2060 = vdwg.mxu0
    %v2061 = vpack.c.bf16 %v1746, %v1694
    %v2062 = vpack.c.bf16 %v1850, %v1798
    %v2063 = vpack.c.bf16 %v1954, %v1902
    %v2064 = vpack.c.bf16 %v2058, %v2006
    %v2065 = vunpack.c.l.bf16 %v2061
    %v2066 = vunpack.c.h.bf16 %v2061
    %v2067 = vunpack.c.l.bf16 %v2062
    %v2068 = vunpack.c.h.bf16 %v2062
    %v2069 = vunpack.c.l.bf16 %v2063
    %v2070 = vunpack.c.h.bf16 %v2063
    %v2071 = vunpack.c.l.bf16 %v2064
    %v2072 = vunpack.c.h.bf16 %v2064
    %v2073 = vmul.f32 %v2065, 0.20019531
    %v2074 = vmul.f32 %v2066, 0.20019531
    %v2075 = vmul.f32 %v2067, 0.20019531
    %v2076 = vmul.f32 %v2068, 0.20019531
    %v2077 = vmul.f32 %v2069, 0.20019531
    %v2078 = vmul.f32 %v2070, 0.20019531
    %v2079 = vmul.f32 %v2071, 0.20019531
    %v2080 = vmul.f32 %v2072, 0.20019531
    %v2081 = vpack.c.bf16 %v2074, %v2073
    %v2082 = vpack.c.bf16 %v2076, %v2075
    %v2083 = vpack.c.bf16 %v2078, %v2077
    %v2084 = vpack.c.bf16 %v2080, %v2079
    %v2085 = vunpack.c.l.bf16 %v2081
    %v2086 = vunpack.c.h.bf16 %v2081
    %v2087 = vunpack.c.l.bf16 %v2082
    %v2088 = vunpack.c.h.bf16 %v2082
    %v2089 = vunpack.c.l.bf16 %v2083
    %v2090 = vunpack.c.h.bf16 %v2083
    %v2091 = vunpack.c.l.bf16 %v2084
    %v2092 = vunpack.c.h.bf16 %v2084
    %v2093 = vmax.f32 %v2065, %v2085
    %v2094 = vmax.f32 %v2066, %v2086
    %v2095 = vmax.f32 %v2067, %v2087
    %v2096 = vmax.f32 %v2068, %v2088
    %v2097 = vmax.f32 %v2069, %v2089
    %v2098 = vmax.f32 %v2070, %v2090
    %v2099 = vmax.f32 %v2071, %v2091
    %v2100 = vmax.f32 %v2072, %v2092
    %v2101 = vpack.c.bf16 %v2093, %v2093
    %v2102 = vpack.c.bf16 %v2094, %v2094
    %v2103 = vpack.c.bf16 %v2095, %v2095
    %v2104 = vpack.c.bf16 %v2096, %v2096
    %v2105 = vpack.c.bf16 %v2097, %v2097
    %v2106 = vpack.c.bf16 %v2098, %v2098
    %v2107 = vpack.c.bf16 %v2099, %v2099
    %v2108 = vpack.c.bf16 %v2100, %v2100
    %v2109 = vld [vmem:[#allocation8] sm:$0xf]
    %v2110 = vld [vmem:[#allocation8 + $0x4] sm:$0xf]
    %v2111 = vld [vmem:[#allocation8 + $0x8] sm:$0xf]
    %v2112 = vld [vmem:[#allocation8 + $0xc] sm:$0xf]
    %v2113 = vld [vmem:[#allocation8 + $0x10] sm:$0xf]
    %v2114 = vld [vmem:[#allocation8 + $0x14] sm:$0xf]
    %v2115 = vld [vmem:[#allocation8 + $0x18] sm:$0xf]
    %v2116 = vld [vmem:[#allocation8 + $0x1c] sm:$0xf]
    %v2117 = vld [vmem:[#allocation8 + $0x20] sm:$0xf]
    %v2118 = vld [vmem:[#allocation8 + $0x24] sm:$0xf]
    %v2119 = vld [vmem:[#allocation8 + $0x28] sm:$0xf]
    %v2120 = vld [vmem:[#allocation8 + $0x2c] sm:$0xf]
    %v2121 = vld [vmem:[#allocation8 + $0x30] sm:$0xf]
    %v2122 = vld [vmem:[#allocation8 + $0x34] sm:$0xf]
    %v2123 = vld [vmem:[#allocation8 + $0x38] sm:$0xf]
    %v2124 = vld [vmem:[#allocation8 + $0x3c] sm:$0xf]
    %v2125 = vld [vmem:[#allocation8 + $0x40] sm:$0xf]
    %v2126 = vld [vmem:[#allocation8 + $0x44] sm:$0xf]
    %v2127 = vld [vmem:[#allocation8 + $0x48] sm:$0xf]
    %v2128 = vld [vmem:[#allocation8 + $0x4c] sm:$0xf]
    %v2129 = vld [vmem:[#allocation8 + $0x50] sm:$0xf]
    %v2130 = vld [vmem:[#allocation8 + $0x54] sm:$0xf]
    %v2131 = vld [vmem:[#allocation8 + $0x58] sm:$0xf]
    %v2132 = vld [vmem:[#allocation8 + $0x5c] sm:$0xf]
    %v2133 = vld [vmem:[#allocation8 + $0x60] sm:$0xf]
    %v2134 = vld [vmem:[#allocation8 + $0x64] sm:$0xf]
    %v2135 = vld [vmem:[#allocation8 + $0x68] sm:$0xf]
    %v2136 = vld [vmem:[#allocation8 + $0x6c] sm:$0xf]
    %v2137 = vld [vmem:[#allocation8 + $0x70] sm:$0xf]
    %v2138 = vld [vmem:[#allocation8 + $0x74] sm:$0xf]
    %v2139 = vld [vmem:[#allocation8 + $0x78] sm:$0xf]
    %v2140 = vld [vmem:[#allocation8 + $0x7c] sm:$0xf]
    %v2141 = vld [vmem:[#allocation8 + $0x80] sm:$0xf]
    %v2142 = vld [vmem:[#allocation8 + $0x84] sm:$0xf]
    %v2143 = vld [vmem:[#allocation8 + $0x88] sm:$0xf]
    %v2144 = vld [vmem:[#allocation8 + $0x8c] sm:$0xf]
    %v2145 = vld [vmem:[#allocation8 + $0x90] sm:$0xf]
    %v2146 = vld [vmem:[#allocation8 + $0x94] sm:$0xf]
    %v2147 = vld [vmem:[#allocation8 + $0x98] sm:$0xf]
    %v2148 = vld [vmem:[#allocation8 + $0x9c] sm:$0xf]
    %v2149 = vld [vmem:[#allocation8 + $0xa0] sm:$0xf]
    %v2150 = vld [vmem:[#allocation8 + $0xa4] sm:$0xf]
    %v2151 = vld [vmem:[#allocation8 + $0xa8] sm:$0xf]
    %v2152 = vld [vmem:[#allocation8 + $0xac] sm:$0xf]
    %v2153 = vld [vmem:[#allocation8 + $0xb0] sm:$0xf]
    %v2154 = vld [vmem:[#allocation8 + $0xb4] sm:$0xf]
    %v2155 = vld [vmem:[#allocation8 + $0xb8] sm:$0xf]
    %v2156 = vld [vmem:[#allocation8 + $0xbc] sm:$0xf]
    %v2157 = vld [vmem:[#allocation8 + $0xc0] sm:$0xf]
    %v2158 = vld [vmem:[#allocation8 + $0xc4] sm:$0xf]
    %v2159 = vld [vmem:[#allocation8 + $0xc8] sm:$0xf]
    %v2160 = vld [vmem:[#allocation8 + $0xcc] sm:$0xf]
    %v2161 = vld [vmem:[#allocation8 + $0xd0] sm:$0xf]
    %v2162 = vld [vmem:[#allocation8 + $0xd4] sm:$0xf]
    %v2163 = vld [vmem:[#allocation8 + $0xd8] sm:$0xf]
    %v2164 = vld [vmem:[#allocation8 + $0xdc] sm:$0xf]
    %v2165 = vld [vmem:[#allocation8 + $0xe0] sm:$0xf]
    %v2166 = vld [vmem:[#allocation8 + $0xe4] sm:$0xf]
    %v2167 = vld [vmem:[#allocation8 + $0xe8] sm:$0xf]
    %v2168 = vld [vmem:[#allocation8 + $0xec] sm:$0xf]
    %v2169 = vld [vmem:[#allocation8 + $0xf0] sm:$0xf]
    %v2170 = vld [vmem:[#allocation8 + $0xf4] sm:$0xf]
    %v2171 = vld [vmem:[#allocation8 + $0xf8] sm:$0xf]
    %v2172 = vld [vmem:[#allocation8 + $0xfc] sm:$0xf]
    %v2173 = vld [vmem:[#allocation8 + $0x100] sm:$0xf]
    %v2174 = vld [vmem:[#allocation8 + $0x104] sm:$0xf]
    %v2175 = vld [vmem:[#allocation8 + $0x108] sm:$0xf]
    %v2176 = vld [vmem:[#allocation8 + $0x10c] sm:$0xf]
    %v2177 = vld [vmem:[#allocation8 + $0x110] sm:$0xf]
    %v2178 = vld [vmem:[#allocation8 + $0x114] sm:$0xf]
    %v2179 = vld [vmem:[#allocation8 + $0x118] sm:$0xf]
    %v2180 = vld [vmem:[#allocation8 + $0x11c] sm:$0xf]
    %v2181 = vld [vmem:[#allocation8 + $0x120] sm:$0xf]
    %v2182 = vld [vmem:[#allocation8 + $0x124] sm:$0xf]
    %v2183 = vld [vmem:[#allocation8 + $0x128] sm:$0xf]
    %v2184 = vld [vmem:[#allocation8 + $0x12c] sm:$0xf]
    %v2185 = vld [vmem:[#allocation8 + $0x130] sm:$0xf]
    %v2186 = vld [vmem:[#allocation8 + $0x134] sm:$0xf]
    %v2187 = vld [vmem:[#allocation8 + $0x138] sm:$0xf]
    %v2188 = vld [vmem:[#allocation8 + $0x13c] sm:$0xf]
    %v2189 = vld [vmem:[#allocation8 + $0x140] sm:$0xf]
    %v2190 = vld [vmem:[#allocation8 + $0x144] sm:$0xf]
    %v2191 = vld [vmem:[#allocation8 + $0x148] sm:$0xf]
    %v2192 = vld [vmem:[#allocation8 + $0x14c] sm:$0xf]
    %v2193 = vld [vmem:[#allocation8 + $0x150] sm:$0xf]
    %v2194 = vld [vmem:[#allocation8 + $0x154] sm:$0xf]
    %v2195 = vld [vmem:[#allocation8 + $0x158] sm:$0xf]
    %v2196 = vld [vmem:[#allocation8 + $0x15c] sm:$0xf]
    %v2197 = vld [vmem:[#allocation8 + $0x160] sm:$0xf]
    %v2198 = vld [vmem:[#allocation8 + $0x164] sm:$0xf]
    %v2199 = vld [vmem:[#allocation8 + $0x168] sm:$0xf]
    %v2200 = vld [vmem:[#allocation8 + $0x16c] sm:$0xf]
    %v2201 = vld [vmem:[#allocation8 + $0x170] sm:$0xf]
    %v2202 = vld [vmem:[#allocation8 + $0x174] sm:$0xf]
    %v2203 = vld [vmem:[#allocation8 + $0x178] sm:$0xf]
    %v2204 = vld [vmem:[#allocation8 + $0x17c] sm:$0xf]
    %v2205 = vld [vmem:[#allocation8 + $0x180] sm:$0xf]
    %v2206 = vld [vmem:[#allocation8 + $0x184] sm:$0xf]
    %v2207 = vld [vmem:[#allocation8 + $0x188] sm:$0xf]
    %v2208 = vld [vmem:[#allocation8 + $0x18c] sm:$0xf]
    %v2209 = vld [vmem:[#allocation8 + $0x190] sm:$0xf]
    %v2210 = vld [vmem:[#allocation8 + $0x194] sm:$0xf]
    %v2211 = vld [vmem:[#allocation8 + $0x198] sm:$0xf]
    %v2212 = vld [vmem:[#allocation8 + $0x19c] sm:$0xf]
    %v2213 = vld [vmem:[#allocation8 + $0x1a0] sm:$0xf]
    %v2214 = vld [vmem:[#allocation8 + $0x1a4] sm:$0xf]
    %v2215 = vld [vmem:[#allocation8 + $0x1a8] sm:$0xf]
    %v2216 = vld [vmem:[#allocation8 + $0x1ac] sm:$0xf]
    %v2217 = vld [vmem:[#allocation8 + $0x1b0] sm:$0xf]
    %v2218 = vld [vmem:[#allocation8 + $0x1b4] sm:$0xf]
    %v2219 = vld [vmem:[#allocation8 + $0x1b8] sm:$0xf]
    %v2220 = vld [vmem:[#allocation8 + $0x1bc] sm:$0xf]
    %v2221 = vld [vmem:[#allocation8 + $0x1c0] sm:$0xf]
    %v2222 = vld [vmem:[#allocation8 + $0x1c4] sm:$0xf]
    %v2223 = vld [vmem:[#allocation8 + $0x1c8] sm:$0xf]
    %v2224 = vld [vmem:[#allocation8 + $0x1cc] sm:$0xf]
    %v2225 = vld [vmem:[#allocation8 + $0x1d0] sm:$0xf]
    %v2226 = vld [vmem:[#allocation8 + $0x1d4] sm:$0xf]
    %v2227 = vld [vmem:[#allocation8 + $0x1d8] sm:$0xf]
    %v2228 = vld [vmem:[#allocation8 + $0x1dc] sm:$0xf]
    %v2229 = vld [vmem:[#allocation8 + $0x1e0] sm:$0xf]
    %v2230 = vld [vmem:[#allocation8 + $0x1e4] sm:$0xf]
    %v2231 = vld [vmem:[#allocation8 + $0x1e8] sm:$0xf]
    %v2232 = vld [vmem:[#allocation8 + $0x1ec] sm:$0xf]
    %v2233 = vld [vmem:[#allocation8 + $0x1f0] sm:$0xf]
    %v2234 = vld [vmem:[#allocation8 + $0x1f4] sm:$0xf]
    %v2235 = vld [vmem:[#allocation8 + $0x1f8] sm:$0xf]
    %v2236 = vld [vmem:[#allocation8 + $0x1fc] sm:$0xf]
    %v2237 = vld [vmem:[%s4] sm:$0x1]
    %v2239 = vperm.slane %v2237, 0
    %v2369 = vunpack.c.l.b16 %v2109
    %v2370 = vunpack.c.l.b16 %v2110
    %v2371 = vunpack.c.l.b16 %v2111
    %v2372 = vunpack.c.l.b16 %v2112
    %v2373 = vunpack.c.l.b16 %v2113
    %v2374 = vunpack.c.l.b16 %v2114
    %v2375 = vunpack.c.l.b16 %v2115
    %v2376 = vunpack.c.l.b16 %v2116
    %v2377 = vunpack.c.l.b16 %v2117
    %v2378 = vunpack.c.l.b16 %v2118
    %v2379 = vunpack.c.l.b16 %v2119
    %v2380 = vunpack.c.l.b16 %v2120
    %v2381 = vunpack.c.l.b16 %v2121
    %v2382 = vunpack.c.l.b16 %v2122
    %v2383 = vunpack.c.l.b16 %v2123
    %v2384 = vunpack.c.l.b16 %v2124
    %v2385 = vunpack.c.l.b16 %v2125
    %v2386 = vunpack.c.l.b16 %v2126
    %v2387 = vunpack.c.l.b16 %v2127
    %v2388 = vunpack.c.l.b16 %v2128
    %v2389 = vunpack.c.l.b16 %v2129
    %v2390 = vunpack.c.l.b16 %v2130
    %v2391 = vunpack.c.l.b16 %v2131
    %v2392 = vunpack.c.l.b16 %v2132
    %v2393 = vunpack.c.l.b16 %v2133
    %v2394 = vunpack.c.l.b16 %v2134
    %v2395 = vunpack.c.l.b16 %v2135
    %v2396 = vunpack.c.l.b16 %v2136
    %v2397 = vunpack.c.l.b16 %v2137
    %v2398 = vunpack.c.l.b16 %v2138
    %v2399 = vunpack.c.l.b16 %v2139
    %v2400 = vunpack.c.l.b16 %v2140
    %v2401 = vunpack.c.l.b16 %v2141
    %v2402 = vunpack.c.l.b16 %v2142
    %v2403 = vunpack.c.l.b16 %v2143
    %v2404 = vunpack.c.l.b16 %v2144
    %v2405 = vunpack.c.l.b16 %v2145
    %v2406 = vunpack.c.l.b16 %v2146
    %v2407 = vunpack.c.l.b16 %v2147
    %v2408 = vunpack.c.l.b16 %v2148
    %v2409 = vunpack.c.l.b16 %v2149
    %v2410 = vunpack.c.l.b16 %v2150
    %v2411 = vunpack.c.l.b16 %v2151
    %v2412 = vunpack.c.l.b16 %v2152
    %v2413 = vunpack.c.l.b16 %v2153
    %v2414 = vunpack.c.l.b16 %v2154
    %v2415 = vunpack.c.l.b16 %v2155
    %v2416 = vunpack.c.l.b16 %v2156
    %v2417 = vunpack.c.l.b16 %v2157
    %v2418 = vunpack.c.l.b16 %v2158
    %v2419 = vunpack.c.l.b16 %v2159
    %v2420 = vunpack.c.l.b16 %v2160
    %v2421 = vunpack.c.l.b16 %v2161
    %v2422 = vunpack.c.l.b16 %v2162
    %v2423 = vunpack.c.l.b16 %v2163
    %v2424 = vunpack.c.l.b16 %v2164
    %v2425 = vunpack.c.l.b16 %v2165
    %v2426 = vunpack.c.l.b16 %v2166
    %v2427 = vunpack.c.l.b16 %v2167
    %v2428 = vunpack.c.l.b16 %v2168
    %v2429 = vunpack.c.l.b16 %v2169
    %v2430 = vunpack.c.l.b16 %v2170
    %v2431 = vunpack.c.l.b16 %v2171
    %v2432 = vunpack.c.l.b16 %v2172
    %v2433 = vunpack.c.l.b16 %v2173
    %v2434 = vunpack.c.l.b16 %v2174
    %v2435 = vunpack.c.l.b16 %v2175
    %v2436 = vunpack.c.l.b16 %v2176
    %v2437 = vunpack.c.l.b16 %v2177
    %v2438 = vunpack.c.l.b16 %v2178
    %v2439 = vunpack.c.l.b16 %v2179
    %v2440 = vunpack.c.l.b16 %v2180
    %v2441 = vunpack.c.l.b16 %v2181
    %v2442 = vunpack.c.l.b16 %v2182
    %v2443 = vunpack.c.l.b16 %v2183
    %v2444 = vunpack.c.l.b16 %v2184
    %v2445 = vunpack.c.l.b16 %v2185
    %v2446 = vunpack.c.l.b16 %v2186
    %v2447 = vunpack.c.l.b16 %v2187
    %v2448 = vunpack.c.l.b16 %v2188
    %v2449 = vunpack.c.l.b16 %v2189
    %v2450 = vunpack.c.l.b16 %v2190
    %v2451 = vunpack.c.l.b16 %v2191
    %v2452 = vunpack.c.l.b16 %v2192
    %v2453 = vunpack.c.l.b16 %v2193
    %v2454 = vunpack.c.l.b16 %v2194
    %v2455 = vunpack.c.l.b16 %v2195
    %v2456 = vunpack.c.l.b16 %v2196
    %v2457 = vunpack.c.l.b16 %v2197
    %v2458 = vunpack.c.l.b16 %v2198
    %v2459 = vunpack.c.l.b16 %v2199
    %v2460 = vunpack.c.l.b16 %v2200
    %v2461 = vunpack.c.l.b16 %v2201
    %v2462 = vunpack.c.l.b16 %v2202
    %v2463 = vunpack.c.l.b16 %v2203
    %v2464 = vunpack.c.l.b16 %v2204
    %v2465 = vunpack.c.l.b16 %v2205
    %v2466 = vunpack.c.l.b16 %v2206
    %v2467 = vunpack.c.l.b16 %v2207
    %v2468 = vunpack.c.l.b16 %v2208
    %v2469 = vunpack.c.l.b16 %v2209
    %v2470 = vunpack.c.l.b16 %v2210
    %v2471 = vunpack.c.l.b16 %v2211
    %v2472 = vunpack.c.l.b16 %v2212
    %v2473 = vunpack.c.l.b16 %v2213
    %v2474 = vunpack.c.l.b16 %v2214
    %v2475 = vunpack.c.l.b16 %v2215
    %v2476 = vunpack.c.l.b16 %v2216
    %v2477 = vunpack.c.l.b16 %v2217
    %v2478 = vunpack.c.l.b16 %v2218
    %v2479 = vunpack.c.l.b16 %v2219
    %v2480 = vunpack.c.l.b16 %v2220
    %v2481 = vunpack.c.l.b16 %v2221
    %v2482 = vunpack.c.l.b16 %v2222
    %v2483 = vunpack.c.l.b16 %v2223
    %v2484 = vunpack.c.l.b16 %v2224
    %v2485 = vunpack.c.l.b16 %v2225
    %v2486 = vunpack.c.l.b16 %v2226
    %v2487 = vunpack.c.l.b16 %v2227
    %v2488 = vunpack.c.l.b16 %v2228
    %v2489 = vunpack.c.l.b16 %v2229
    %v2490 = vunpack.c.l.b16 %v2230
    %v2491 = vunpack.c.l.b16 %v2231
    %v2492 = vunpack.c.l.b16 %v2232
    %v2493 = vunpack.c.l.b16 %v2233
    %v2494 = vunpack.c.l.b16 %v2234
    %v2495 = vunpack.c.l.b16 %v2235
    %v2496 = vunpack.c.l.b16 %v2236
    %v2497 = vpack.c.b16 %v2370, %v2369
    %v2498 = vpack.c.b16 %v2372, %v2371
    %v2499 = vpack.c.b16 %v2374, %v2373
    %v2500 = vpack.c.b16 %v2376, %v2375
    %v2501 = vpack.c.b16 %v2378, %v2377
    %v2502 = vpack.c.b16 %v2380, %v2379
    %v2503 = vpack.c.b16 %v2382, %v2381
    %v2504 = vpack.c.b16 %v2384, %v2383
    %v2505 = vpack.c.b16 %v2386, %v2385
    %v2506 = vpack.c.b16 %v2388, %v2387
    %v2507 = vpack.c.b16 %v2390, %v2389
    %v2508 = vpack.c.b16 %v2392, %v2391
    %v2509 = vpack.c.b16 %v2394, %v2393
    %v2510 = vpack.c.b16 %v2396, %v2395
    %v2511 = vpack.c.b16 %v2398, %v2397
    %v2512 = vpack.c.b16 %v2400, %v2399
    %v2513 = vpack.c.b16 %v2402, %v2401
    %v2514 = vpack.c.b16 %v2404, %v2403
    %v2515 = vpack.c.b16 %v2406, %v2405
    %v2516 = vpack.c.b16 %v2408, %v2407
    %v2517 = vpack.c.b16 %v2410, %v2409
    %v2518 = vpack.c.b16 %v2412, %v2411
    %v2519 = vpack.c.b16 %v2414, %v2413
    %v2520 = vpack.c.b16 %v2416, %v2415
    %v2521 = vpack.c.b16 %v2418, %v2417
    %v2522 = vpack.c.b16 %v2420, %v2419
    %v2523 = vpack.c.b16 %v2422, %v2421
    %v2524 = vpack.c.b16 %v2424, %v2423
    %v2525 = vpack.c.b16 %v2426, %v2425
    %v2526 = vpack.c.b16 %v2428, %v2427
    %v2527 = vpack.c.b16 %v2430, %v2429
    %v2528 = vpack.c.b16 %v2432, %v2431
    %v2529 = vpack.c.b16 %v2434, %v2433
    %v2530 = vpack.c.b16 %v2436, %v2435
    %v2531 = vpack.c.b16 %v2438, %v2437
    %v2532 = vpack.c.b16 %v2440, %v2439
    %v2533 = vpack.c.b16 %v2442, %v2441
    %v2534 = vpack.c.b16 %v2444, %v2443
    %v2535 = vpack.c.b16 %v2446, %v2445
    %v2536 = vpack.c.b16 %v2448, %v2447
    %v2537 = vpack.c.b16 %v2450, %v2449
    %v2538 = vpack.c.b16 %v2452, %v2451
    %v2539 = vpack.c.b16 %v2454, %v2453
    %v2540 = vpack.c.b16 %v2456, %v2455
    %v2541 = vpack.c.b16 %v2458, %v2457
    %v2542 = vpack.c.b16 %v2460, %v2459
    %v2543 = vpack.c.b16 %v2462, %v2461
    %v2544 = vpack.c.b16 %v2464, %v2463
    %v2545 = vpack.c.b16 %v2466, %v2465
    %v2546 = vpack.c.b16 %v2468, %v2467
    %v2547 = vpack.c.b16 %v2470, %v2469
    %v2548 = vpack.c.b16 %v2472, %v2471
    %v2549 = vpack.c.b16 %v2474, %v2473
    %v2550 = vpack.c.b16 %v2476, %v2475
    %v2551 = vpack.c.b16 %v2478, %v2477
    %v2552 = vpack.c.b16 %v2480, %v2479
    %v2553 = vpack.c.b16 %v2482, %v2481
    %v2554 = vpack.c.b16 %v2484, %v2483
    %v2555 = vpack.c.b16 %v2486, %v2485
    %v2556 = vpack.c.b16 %v2488, %v2487
    %v2557 = vpack.c.b16 %v2490, %v2489
    %v2558 = vpack.c.b16 %v2492, %v2491
    %v2559 = vpack.c.b16 %v2494, %v2493
    %v2560 = vpack.c.b16 %v2496, %v2495
    %2625 = vmatpush.bf16.msra.mxu0 %v2504
    %2626 = vmatpush.bf16.msra.mxu0 %v2503
    %2627 = vmatpush.bf16.msra.mxu0 %v2502
    %2628 = vmatpush.bf16.msra.mxu0 %v2501
    %2629 = vmatpush.bf16.msra.mxu0 %v2500
    %2630 = vmatpush.bf16.msra.mxu0 %v2499
    %2631 = vmatpush.bf16.msra.mxu0 %v2498
    %2632 = vmatpush.bf16.msra.mxu0 %v2497
    %2633 = vmatmul.bf16.gmra.mxu0 %v2101
    %v2634 = vpop.f32.mrf.mxu0
    %v2635 = vadd.f32 %v2239, %v2634
    %v2636 = vpop.f32.mrf.mxu0
    %2637 = vdwg.mxu0
    %2638 = vmatpush.bf16.msra.mxu0 %v2512
    %2639 = vmatpush.bf16.msra.mxu0 %v2511
    %2640 = vmatpush.bf16.msra.mxu0 %v2510
    %2641 = vmatpush.bf16.msra.mxu0 %v2509
    %2642 = vmatpush.bf16.msra.mxu0 %v2508
    %2643 = vmatpush.bf16.msra.mxu0 %v2507
    %2644 = vmatpush.bf16.msra.mxu0 %v2506
    %2645 = vmatpush.bf16.msra.mxu0 %v2505
    %2646 = vmatmul.bf16.gmra.mxu0 %v2102
    %v2647 = vpop.f32.mrf.mxu0
    %v2648 = vadd.f32 %v2635, %v2647
    %v2649 = vpop.f32.mrf.mxu0
    %2650 = vdwg.mxu0
    %2651 = vmatpush.bf16.msra.mxu0 %v2520
    %2652 = vmatpush.bf16.msra.mxu0 %v2519
    %2653 = vmatpush.bf16.msra.mxu0 %v2518
    %2654 = vmatpush.bf16.msra.mxu0 %v2517
    %2655 = vmatpush.bf16.msra.mxu0 %v2516
    %2656 = vmatpush.bf16.msra.mxu0 %v2515
    %2657 = vmatpush.bf16.msra.mxu0 %v2514
    %2658 = vmatpush.bf16.msra.mxu0 %v2513
    %2659 = vmatmul.bf16.gmra.mxu0 %v2103
    %v2660 = vpop.f32.mrf.mxu0
    %v2661 = vadd.f32 %v2648, %v2660
    %v2662 = vpop.f32.mrf.mxu0
    %2663 = vdwg.mxu0
    %2664 = vmatpush.bf16.msra.mxu0 %v2528
    %2665 = vmatpush.bf16.msra.mxu0 %v2527
    %2666 = vmatpush.bf16.msra.mxu0 %v2526
    %2667 = vmatpush.bf16.msra.mxu0 %v2525
    %2668 = vmatpush.bf16.msra.mxu0 %v2524
    %2669 = vmatpush.bf16.msra.mxu0 %v2523
    %2670 = vmatpush.bf16.msra.mxu0 %v2522
    %2671 = vmatpush.bf16.msra.mxu0 %v2521
    %2672 = vmatmul.bf16.gmra.mxu0 %v2104
    %v2673 = vpop.f32.mrf.mxu0
    %v2674 = vadd.f32 %v2661, %v2673
    %v2675 = vpop.f32.mrf.mxu0
    %2676 = vdwg.mxu0
    %2677 = vmatpush.bf16.msra.mxu0 %v2536
    %2678 = vmatpush.bf16.msra.mxu0 %v2535
    %2679 = vmatpush.bf16.msra.mxu0 %v2534
    %2680 = vmatpush.bf16.msra.mxu0 %v2533
    %2681 = vmatpush.bf16.msra.mxu0 %v2532
    %2682 = vmatpush.bf16.msra.mxu0 %v2531
    %2683 = vmatpush.bf16.msra.mxu0 %v2530
    %2684 = vmatpush.bf16.msra.mxu0 %v2529
    %2685 = vmatmul.bf16.gmra.mxu0 %v2105
    %v2686 = vpop.f32.mrf.mxu0
    %v2687 = vadd.f32 %v2674, %v2686
    %v2688 = vpop.f32.mrf.mxu0
    %2689 = vdwg.mxu0
    %2690 = vmatpush.bf16.msra.mxu0 %v2544
    %2691 = vmatpush.bf16.msra.mxu0 %v2543
    %2692 = vmatpush.bf16.msra.mxu0 %v2542
    %2693 = vmatpush.bf16.msra.mxu0 %v2541
    %2694 = vmatpush.bf16.msra.mxu0 %v2540
    %2695 = vmatpush.bf16.msra.mxu0 %v2539
    %2696 = vmatpush.bf16.msra.mxu0 %v2538
    %2697 = vmatpush.bf16.msra.mxu0 %v2537
    %2698 = vmatmul.bf16.gmra.mxu0 %v2106
    %v2699 = vpop.f32.mrf.mxu0
    %v2700 = vadd.f32 %v2687, %v2699
    %v2701 = vpop.f32.mrf.mxu0
    %2702 = vdwg.mxu0
    %2703 = vmatpush.bf16.msra.mxu0 %v2552
    %2704 = vmatpush.bf16.msra.mxu0 %v2551
    %2705 = vmatpush.bf16.msra.mxu0 %v2550
    %2706 = vmatpush.bf16.msra.mxu0 %v2549
    %2707 = vmatpush.bf16.msra.mxu0 %v2548
    %2708 = vmatpush.bf16.msra.mxu0 %v2547
    %2709 = vmatpush.bf16.msra.mxu0 %v2546
    %2710 = vmatpush.bf16.msra.mxu0 %v2545
    %2711 = vmatmul.bf16.gmra.mxu0 %v2107
    %v2712 = vpop.f32.mrf.mxu0
    %v2713 = vadd.f32 %v2700, %v2712
    %v2714 = vpop.f32.mrf.mxu0
    %2715 = vdwg.mxu0
    %2716 = vmatpush.bf16.msra.mxu0 %v2560
    %2717 = vmatpush.bf16.msra.mxu0 %v2559
    %2718 = vmatpush.bf16.msra.mxu0 %v2558
    %2719 = vmatpush.bf16.msra.mxu0 %v2557
    %2720 = vmatpush.bf16.msra.mxu0 %v2556
    %2721 = vmatpush.bf16.msra.mxu0 %v2555
    %2722 = vmatpush.bf16.msra.mxu0 %v2554
    %2723 = vmatpush.bf16.msra.mxu0 %v2553
    %2724 = vmatmul.bf16.gmra.mxu0 %v2108
    %v2725 = vpop.f32.mrf.mxu0
    %v2726 = vadd.f32 %v2713, %v2725
    %v2727 = vpop.f32.mrf.mxu0
    %2728 = vdwg.mxu0
    %v2729 = vxor.u32 %v2726, 2147483648
    %v2730 = vmul.f32 %v2729, 1.442695
    %v2731 = vpow.pop %v2730
    %v2732 = vadd.f32 %v2731, 1.0
    %v2733 = vrcp.pop %v2732
    %v2734 = vmul.f32 %v2732, %v2733
    %v2735 = vsub.f32 1.0, %v2734
    %v2736 = vmul.f32 %v2733, %v2735
    %v2737 = vadd.f32 %v2733, %v2736
    %vm2738 = vweird.f32 %v2732
    %vm2739 = vweird.f32 %v2733
    %vm2740 = vmor %vm2738, %vm2739
    %v2741 = vsel %vm2740, %v2733, %v2737
    %v2742 = vand.u32 2147483647, %v2732
    %vm2743 = vcmp.eq.f32.partialorder %v2742, 8.507059e+37
    %v2744 = vand.u32 %v2732, 2147483648
    %v2745 = vor.u32 1.1754944e-38, %v2744
    %v2746 = vsel %vm2743, %v2745, %v2741
    %v2747 = vmul.f32 1.0, %v2746
    %2748 = vst [vmem:[#allocation10] sm:$0x3] %v2747
    // Predicated region
    $region38: #{tpu_custom_call.1} parent=1 // pred_check
      _
    $region39: #{tpu_custom_call.1} parent=1 // pred_check_branch
      %2750 = sbr.rel (0) target = $region41
    $region40: #{tpu_custom_call.1} parent=1 // pred_region
      %2752 = vsyncadd [#allocation4], 0
      %s2754 = sshll.u32 [#allocation10], 4
      %s2755 = int_to_ptr.vmem [resolvable:$true] %s2754
      %s2756 = sshll.u32 %s5, 4
      %s2757 = int_to_ptr.hbm [resolvable:$true] %s2756
      %2759 = dma.vmem_to_hbm [thread:$0]  %s2755, 32, %s2757, [#allocation4]
    $region41: #{tpu_custom_call.1} parent=1 // pred_fallthru
      _
    // Predicated region
    $region42: #{tpu_custom_call.1} parent=1 // pred_check
      _
    $region43: #{tpu_custom_call.1} parent=1 // pred_check_branch
      %2761 = sbr.rel (0) target = $region45
    $region44: #{tpu_custom_call.1} parent=1 // pred_region
      %2763 = dma.done [#allocation4], 32
    $region45: #{tpu_custom_call.1} parent=1 // pred_fallthru
      _
    %2764 = vsyncpa [#allocation3], 1
    %2765 = vsyncpa [#allocation6], 1
    %2766 = vsyncpa [#allocation9], 1
    %2767 = vsyncpa [#allocation4], 1

</llo_original>
